<compile_context>
chip_gen: v5e
topology: v5e:2x2
jax: 0.10.0
libtpu: 0.0.40
codegen_flags: <defaults>
</compile_context>

<pallas_src>
import functools

import jax
import jax.numpy as jnp
import numpy as np
from jax import lax
from jax.experimental import pallas as pl
from jax.experimental.pallas import tpu as pltpu


def _contrastive_tile_kernel(imap_ref, jmap_ref, valid_ref,
                             xi_ref, xj_ref, sqi_ref, sqj_ref, li_ref, lj_ref,
                             out_ref, acc_ref,
                             *, margin, batch, steps_per_core, has_pad):
    c = pl.program_id(0)          # core-split axis ("parallel")
    t = pl.program_id(1)          # linearized triangular step ("arbitrary")
    idx = c * steps_per_core + t  # position in the prefetched schedule

    @pl.when(t == 0)
    def _():
        acc_ref[...] = jnp.zeros_like(acc_ref)

    @pl.when(valid_ref[idx] == 1)
    def _():
        i_blk = imap_ref[idx]
        j_blk = jmap_ref[idx]
        tm = xi_ref.shape[0]
        tn = xj_ref.shape[0]

        xi = xi_ref[...]          # (TM, D) f32 row-embedding tile
        xj = xj_ref[...]          # (TN, D) f32 col-embedding tile

        # Gram tile on the MXU; contract dim 1 of both operands (no transpose).
        gram = lax.dot_general(xi, xj, (((1,), (1,)), ((), ())),
                               preferred_element_type=jnp.float32)   # (TM, TN)

        # Squared norms are precomputed in the wrapper and streamed in.
        d2 = jnp.maximum(sqi_ref[...] + sqj_ref[...] - 2.0 * gram, 0.0)
        dist = jnp.sqrt(d2)
        hinge = jnp.maximum(margin - dist, 0.0)
        same = li_ref[...] == lj_ref[...]          # (TM,1)==(1,TN) -> (TM,TN)
        per_pair = jnp.where(same, d2, hinge * hinge)

        ones8 = jnp.ones((8, tm), jnp.float32)

        def accumulate(masked):
            # Row-reduce the tile on the (otherwise idle) MXU: (8,TM)@(TM,TN).
            partial = lax.dot_general(ones8, masked, (((1,), (0,)), ((), ())),
                                      preferred_element_type=jnp.float32)
            if has_pad:
                # Padded columns exist only in the last j block; masking the
                # tiny (1,TN) partial commutes with the row reduction.
                col_ok = (j_blk * tn
                          + lax.broadcasted_iota(jnp.int32, (1, tn), 1)) < batch
                partial = jnp.where(col_ok, partial, 0.0)
            acc_ref[...] = acc_ref[...] + partial

        # Diagonal block: strict upper triangle only (local indices suffice).
        @pl.when(i_blk == j_blk)
        def _():
            row = lax.broadcasted_iota(jnp.int32, (tm, tn), 0)
            col = lax.broadcasted_iota(jnp.int32, (tm, tn), 1)
            accumulate(jnp.where(row < col, per_pair, 0.0))

        # Off-diagonal blocks of the triangular schedule satisfy i<j everywhere
        # and never contain padded rows -> no per-element mask at all.
        @pl.when(i_blk != j_blk)
        def _():
            accumulate(per_pair)

    @pl.when(t == steps_per_core - 1)
    def _():
        out_ref[...] = acc_ref[...].reshape(out_ref.shape)


def _round_up(x, m):
    return (x + m - 1) // m * m


def online_contrastive_loss(embeddings, labels, margin, *, num_core_splits=2):
    """embeddings: (B, D) float, labels: (B,) int -> scalar float32 loss."""
    B, D = embeddings.shape
    assert B >= 2, "need at least one pair"

    tile = 256 if B > 128 else 128
    b_pad = _round_up(B, tile)
    n_blk = b_pad // tile
    has_pad = b_pad != B

    emb = jnp.zeros((b_pad, D), jnp.float32).at[:B].set(
        embeddings.astype(jnp.float32))
    lab = jnp.full((b_pad,), -1, jnp.int32).at[:B].set(labels.astype(jnp.int32))
    sq = jnp.sum(emb * emb, axis=1)              # squared norms, computed once

    lab_col = lab.reshape(b_pad, 1)
    lab_row = lab.reshape(1, b_pad)
    sq_col = sq.reshape(b_pad, 1)
    sq_row = sq.reshape(1, b_pad)

    # Linearized upper-triangular (incl. diagonal) block schedule, split evenly
    # across `num_core_splits` for v7x megacore balance. Padded slots are
    # flagged invalid and skipped in-kernel.
    pairs = [(i, j) for i in range(n_blk) for j in range(i, n_blk)]
    n_tiles = len(pairs)
    spc = -(-n_tiles // num_core_splits)         # steps per core
    total = num_core_splits * spc
    i_arr = np.zeros((total,), np.int32)
    j_arr = np.zeros((total,), np.int32)
    v_arr = np.zeros((total,), np.int32)
    for k, (i, j) in enumerate(pairs):
        i_arr[k], j_arr[k], v_arr[k] = i, j, 1
    i_map = jnp.asarray(i_arr)
    j_map = jnp.asarray(j_arr)
    v_map = jnp.asarray(v_arr)

    kernel = functools.partial(_contrastive_tile_kernel, margin=float(margin),
                               batch=B, steps_per_core=spc, has_pad=has_pad)

    def row_idx(c, t, im, jm, vm):
        return (im[c * spc + t], 0)

    def col_emb_idx(c, t, im, jm, vm):
        return (jm[c * spc + t], 0)

    def col_vec_idx(c, t, im, jm, vm):
        return (0, jm[c * spc + t])

    # NOTE: correctness relies on the t axis being iterated completely and
    # in-order per core (reset at t==0, writeback at t==last) -> keep it
    # "arbitrary"; only the core-split axis is "parallel".
    out = pl.pallas_call(
        kernel,
        out_shape=jax.ShapeDtypeStruct((num_core_splits, 8, tile), jnp.float32),
        grid_spec=pltpu.PrefetchScalarGridSpec(
            num_scalar_prefetch=3,
            grid=(num_core_splits, spc),
            in_specs=[
                pl.BlockSpec((tile, D), row_idx),        # row embeddings
                pl.BlockSpec((tile, D), col_emb_idx),    # col embeddings
                pl.BlockSpec((tile, 1), row_idx),        # row squared norms
                pl.BlockSpec((1, tile), col_vec_idx),    # col squared norms
                pl.BlockSpec((tile, 1), row_idx),        # row labels
                pl.BlockSpec((1, tile), col_vec_idx),    # col labels
            ],
            out_specs=pl.BlockSpec((1, 8, tile),
                                   lambda c, t, im, jm, vm: (c, 0, 0)),
            scratch_shapes=[pltpu.VMEM((8, tile), jnp.float32)],
        ),
        compiler_params=pltpu.CompilerParams(
            dimension_semantics=("parallel", "arbitrary"),
            vmem_limit_bytes=32 * 1024 * 1024,
        ),
    )(i_map, j_map, v_map, emb, emb, sq_col, sq_row, lab_col, lab_row)

    count = B * (B - 1) // 2                     # analytic compile-time constant
    # Rows of each (8, tile) block are identical column-partial sums; sum one
    # row per core here (single tiny host-side reduction).
    return jnp.sum(out[:, 0, :]) / jnp.float32(count)


def _reference_loss(embeddings, labels, margin):
    """NumPy reference mirroring the PyTorch code (all i<j pairs)."""
    emb = np.asarray(embeddings, dtype=np.float64)
    lab = np.asarray(labels)
    iu, ju = np.triu_indices(emb.shape[0], k=1)
    d2 = ((emb[iu] - emb[ju]) ** 2).sum(1)
    same = lab[iu] == lab[ju]
    pos_loss = d2[same]
    neg_loss = np.maximum(margin - np.sqrt(d2[~same]), 0.0) ** 2
    return float(np.concatenate([pos_loss, neg_loss]).mean())


if __name__ == "__main__":
    key = jax.random.PRNGKey(0)
    k0, k1, k2 = jax.random.split(key, 3)

    # Small case (toy shapes consistent with the module's forward).
    B, D, margin = 8, 32, 1.0
    emb_small = jax.random.normal(k0, (B, D), dtype=jnp.float32)
    lab_small = jnp.array([0, 0, 1, 1, 0, 1, 0, 1], dtype=jnp.int32)
    loss = jax.block_until_ready(online_contrastive_loss(emb_small, lab_small, margin))
    ref = _reference_loss(emb_small, lab_small, margin)
    assert np.allclose(float(loss), ref, rtol=2e-3, atol=1e-4), (float(loss), ref)

    # Larger case exercising the triangular schedule, padding, diagonal mask
    # specialization, and the 2-way core split (padded invalid step).
    B2, D2, margin2 = 300, 64, 12.0
    emb_big = jax.random.normal(k1, (B2, D2), dtype=jnp.float32)
    lab_big = jax.random.randint(k2, (B2,), 0, 5, dtype=jnp.int32)
    loss2 = jax.block_until_ready(online_contrastive_loss(emb_big, lab_big, margin2))
    ref2 = _reference_loss(emb_big, lab_big, margin2)
    assert np.allclose(float(loss2), ref2, rtol=2e-3, atol=1e-4), (float(loss2), ref2)

    print("KERNEL_OK")
</pallas_src>

<mosaic_0001>
module attributes {stable_mosaic.version = 11 : i64} {
  func.func @_contrastive_tile_kernel(%arg0: i32, %arg1: i32, %arg2: memref<2xi32, #tpu.memory_space<smem>>, %arg3: memref<2xi32, #tpu.memory_space<smem>>, %arg4: memref<2xi32, #tpu.memory_space<smem>>, %arg5: memref<128x32xf32, #tpu.memory_space<vmem>>, %arg6: memref<128x32xf32, #tpu.memory_space<vmem>>, %arg7: memref<128x1xf32, #tpu.memory_space<vmem>>, %arg8: memref<1x128xf32, #tpu.memory_space<vmem>>, %arg9: memref<128x1xi32, #tpu.memory_space<vmem>>, %arg10: memref<1x128xi32, #tpu.memory_space<vmem>>, %arg11: memref<1x8x128xf32, #tpu.memory_space<vmem>>, %arg12: memref<8x128xf32, #tpu.memory_space<vmem>>) attributes {dimension_semantics = [#tpu.dimension_semantics<parallel>, #tpu.dimension_semantics<arbitrary>], iteration_bounds = array<i64: 2, 1>, scalar_prefetch = 3 : i64, scratch_operands = 1 : i64, tpu.core_type = #tpu.core_type<tc>, window_params = [{transform_indices = @transform_0, window_bounds = array<i64: 128, 32>}, {transform_indices = @transform_1, window_bounds = array<i64: 128, 32>}, {transform_indices = @transform_2, window_bounds = array<i64: 128, 1>}, {transform_indices = @transform_3, window_bounds = array<i64: 1, 128>}, {transform_indices = @transform_4, window_bounds = array<i64: 128, 1>}, {transform_indices = @transform_5, window_bounds = array<i64: 1, 128>}, {transform_indices = @transform_6, window_bounds = array<i64: 1, 8, 128>}]} {
    %c1_i32 = arith.constant 1 : i32
    %0 = arith.muli %arg0, %c1_i32 : i32
    %1 = arith.addi %0, %arg1 : i32
    %c0_i32 = arith.constant 0 : i32
    %2 = arith.cmpi eq, %arg1, %c0_i32 : i32
    %3 = arith.extui %2 : i1 to i32
    %c0_i32_0 = arith.constant 0 : i32
    %4 = arith.cmpi ne, %3, %c0_i32_0 : i32
    scf.if %4 {
      %cst = arith.constant 0.000000e+00 : f32
      %13 = vector.broadcast %cst : f32 to vector<8x128xf32>
      %c0 = arith.constant 0 : index
      %c0_5 = arith.constant 0 : index
      %14 = vector.load %arg12[%c0, %c0_5] : memref<8x128xf32, #tpu.memory_space<vmem>>, vector<8x128xf32>
      tpu.vector_store %arg12[%c0, %c0_5], %13 {strides = array<i32>} : memref<8x128xf32, #tpu.memory_space<vmem>>, vector<8x128xf32>,
    } else {
    }
    %5 = arith.index_cast %1 : i32 to index
    %6 = memref.load %arg4[%5] : memref<2xi32, #tpu.memory_space<smem>>
    %c1_i32_1 = arith.constant 1 : i32
    %7 = arith.cmpi eq, %6, %c1_i32_1 : i32
    %8 = arith.extui %7 : i1 to i32
    %c0_i32_2 = arith.constant 0 : i32
    %9 = arith.cmpi ne, %8, %c0_i32_2 : i32
    scf.if %9 {
      %13 = arith.index_cast %1 : i32 to index
      %14 = memref.load %arg2[%13] : memref<2xi32, #tpu.memory_space<smem>>
      %15 = arith.index_cast %1 : i32 to index
      %16 = memref.load %arg3[%15] : memref<2xi32, #tpu.memory_space<smem>>
      %c0 = arith.constant 0 : index
      %c0_5 = arith.constant 0 : index
      %17 = vector.load %arg5[%c0, %c0_5] : memref<128x32xf32, #tpu.memory_space<vmem>>, vector<128x32xf32>
      %c0_6 = arith.constant 0 : index
      %c0_7 = arith.constant 0 : index
      %18 = vector.load %arg6[%c0_6, %c0_7] : memref<128x32xf32, #tpu.memory_space<vmem>>, vector<128x32xf32>
      %cst = arith.constant dense<0.000000e+00> : vector<128x128xf32>
      %19 = tpu.matmul %17, %18, %cst {dimension_numbers = #tpu.dot_dimension_numbers<[1], [1], [0], [0], [0, 0, 1, 0], [], []>} : vector<128x32xf32>, vector<128x32xf32>, vector<128x128xf32> -> vector<128x128xf32>
      %c0_8 = arith.constant 0 : index
      %c0_9 = arith.constant 0 : index
      %20 = vector.load %arg7[%c0_8, %c0_9] : memref<128x1xf32, #tpu.memory_space<vmem>>, vector<128x1xf32>
      %c0_10 = arith.constant 0 : index
      %c0_11 = arith.constant 0 : index
      %21 = vector.load %arg8[%c0_10, %c0_11] : memref<1x128xf32, #tpu.memory_space<vmem>>, vector<1x128xf32>
      %22 = vector.broadcast %20 : vector<128x1xf32> to vector<128x128xf32>
      %23 = vector.broadcast %21 : vector<1x128xf32> to vector<128x128xf32>
      %24 = arith.addf %22, %23 : vector<128x128xf32>
      %cst_12 = arith.constant 2.000000e+00 : f32
      %25 = vector.broadcast %cst_12 : f32 to vector<128x128xf32>
      %26 = arith.mulf %25, %19 : vector<128x128xf32>
      %27 = arith.subf %24, %26 : vector<128x128xf32>
      %cst_13 = arith.constant 0.000000e+00 : f32
      %28 = vector.broadcast %cst_13 : f32 to vector<128x128xf32>
      %29 = arith.maximumf %27, %28 : vector<128x128xf32>
      %30 = math.sqrt %29 : vector<128x128xf32>
      %cst_14 = arith.constant 1.000000e+00 : f32
      %31 = vector.broadcast %cst_14 : f32 to vector<128x128xf32>
      %32 = arith.subf %31, %30 : vector<128x128xf32>
      %cst_15 = arith.constant 0.000000e+00 : f32
      %33 = vector.broadcast %cst_15 : f32 to vector<128x128xf32>
      %34 = arith.maximumf %32, %33 : vector<128x128xf32>
      %c0_16 = arith.constant 0 : index
      %c0_17 = arith.constant 0 : index
      %35 = vector.load %arg9[%c0_16, %c0_17] : memref<128x1xi32, #tpu.memory_space<vmem>>, vector<128x1xi32>
      %c0_18 = arith.constant 0 : index
      %c0_19 = arith.constant 0 : index
      %36 = vector.load %arg10[%c0_18, %c0_19] : memref<1x128xi32, #tpu.memory_space<vmem>>, vector<1x128xi32>
      %37 = vector.broadcast %35 : vector<128x1xi32> to vector<128x128xi32>
      %38 = vector.broadcast %36 : vector<1x128xi32> to vector<128x128xi32>
      %39 = arith.cmpi eq, %37, %38 : vector<128x128xi32>
      %40 = arith.mulf %34, %34 : vector<128x128xf32>
      %41 = arith.select %39, %29, %40 : vector<128x128xi1>, vector<128x128xf32>
      %cst_20 = arith.constant 1.000000e+00 : f32
      %42 = vector.broadcast %cst_20 : f32 to vector<8x128xf32>
      %43 = arith.cmpi eq, %14, %16 : i32
      %44 = arith.extui %43 : i1 to i32
      %c0_i32_21 = arith.constant 0 : i32
      %45 = arith.cmpi ne, %44, %c0_i32_21 : i32
      scf.if %45 {
        %49 = tpu.iota {dimensions = array<i32: 0>} : vector<128x128xi32>
        %50 = tpu.iota {dimensions = array<i32: 1>} : vector<128x128xi32>
        %51 = arith.cmpi slt, %49, %50 : vector<128x128xi32>
        %cst_23 = arith.constant 0.000000e+00 : f32
        %52 = vector.broadcast %cst_23 : f32 to vector<128x128xf32>
        %53 = arith.select %51, %41, %52 : vector<128x128xi1>, vector<128x128xf32>
        %cst_24 = arith.constant dense<0.000000e+00> : vector<8x128xf32>
        %54 = tpu.matmul %42, %53, %cst_24 {dimension_numbers = #tpu.dot_dimension_numbers<[1], [0], [0], [1], [0, 0, 1, 1], [], []>} : vector<8x128xf32>, vector<128x128xf32>, vector<8x128xf32> -> vector<8x128xf32>
        %c128_i32 = arith.constant 128 : i32
        %55 = arith.muli %16, %c128_i32 : i32
        %56 = tpu.iota {dimensions = array<i32: 1>} : vector<1x128xi32>
        %57 = vector.broadcast %55 : i32 to vector<1x128xi32>
        %58 = arith.addi %57, %56 : vector<1x128xi32>
        %c8_i32 = arith.constant 8 : i32
        %59 = vector.broadcast %c8_i32 : i32 to vector<1x128xi32>
        %60 = arith.cmpi slt, %58, %59 : vector<1x128xi32>
        %cst_25 = arith.constant 0.000000e+00 : f32
        %61 = vector.shape_cast %60 : vector<1x128xi1> to vector<1x128xi1>
        %62 = vector.broadcast %61 : vector<1x128xi1> to vector<8x128xi1>
        %63 = vector.broadcast %cst_25 : f32 to vector<8x128xf32>
        %64 = arith.select %62, %54, %63 : vector<8x128xi1>, vector<8x128xf32>
        %c0_26 = arith.constant 0 : index
        %c0_27 = arith.constant 0 : index
        %65 = vector.load %arg12[%c0_26, %c0_27] : memref<8x128xf32, #tpu.memory_space<vmem>>, vector<8x128xf32>
        %66 = arith.addf %65, %64 : vector<8x128xf32>
        %c0_28 = arith.constant 0 : index
        %c0_29 = arith.constant 0 : index
        %67 = vector.load %arg12[%c0_28, %c0_29] : memref<8x128xf32, #tpu.memory_space<vmem>>, vector<8x128xf32>
        tpu.vector_store %arg12[%c0_28, %c0_29], %66 {strides = array<i32>} : memref<8x128xf32, #tpu.memory_space<vmem>>, vector<8x128xf32>,
      } else {
      }
      %46 = arith.cmpi ne, %14, %16 : i32
      %47 = arith.extui %46 : i1 to i32
      %c0_i32_22 = arith.constant 0 : i32
      %48 = arith.cmpi ne, %47, %c0_i32_22 : i32
      scf.if %48 {
        %cst_23 = arith.constant dense<0.000000e+00> : vector<8x128xf32>
        %49 = tpu.matmul %42, %41, %cst_23 {dimension_numbers = #tpu.dot_dimension_numbers<[1], [0], [0], [1], [0, 0, 1, 1], [], []>} : vector<8x128xf32>, vector<128x128xf32>, vector<8x128xf32> -> vector<8x128xf32>
        %c128_i32 = arith.constant 128 : i32
        %50 = arith.muli %16, %c128_i32 : i32
        %51 = tpu.iota {dimensions = array<i32: 1>} : vector<1x128xi32>
        %52 = vector.broadcast %50 : i32 to vector<1x128xi32>
        %53 = arith.addi %52, %51 : vector<1x128xi32>
        %c8_i32 = arith.constant 8 : i32
        %54 = vector.broadcast %c8_i32 : i32 to vector<1x128xi32>
        %55 = arith.cmpi slt, %53, %54 : vector<1x128xi32>
        %cst_24 = arith.constant 0.000000e+00 : f32
        %56 = vector.shape_cast %55 : vector<1x128xi1> to vector<1x128xi1>
        %57 = vector.broadcast %56 : vector<1x128xi1> to vector<8x128xi1>
        %58 = vector.broadcast %cst_24 : f32 to vector<8x128xf32>
        %59 = arith.select %57, %49, %58 : vector<8x128xi1>, vector<8x128xf32>
        %c0_25 = arith.constant 0 : index
        %c0_26 = arith.constant 0 : index
        %60 = vector.load %arg12[%c0_25, %c0_26] : memref<8x128xf32, #tpu.memory_space<vmem>>, vector<8x128xf32>
        %61 = arith.addf %60, %59 : vector<8x128xf32>
        %c0_27 = arith.constant 0 : index
        %c0_28 = arith.constant 0 : index
        %62 = vector.load %arg12[%c0_27, %c0_28] : memref<8x128xf32, #tpu.memory_space<vmem>>, vector<8x128xf32>
        tpu.vector_store %arg12[%c0_27, %c0_28], %61 {strides = array<i32>} : memref<8x128xf32, #tpu.memory_space<vmem>>, vector<8x128xf32>,
      } else {
      }
    } else {
    }
    %c0_i32_3 = arith.constant 0 : i32
    %10 = arith.cmpi eq, %arg1, %c0_i32_3 : i32
    %11 = arith.extui %10 : i1 to i32
    %c0_i32_4 = arith.constant 0 : i32
    %12 = arith.cmpi ne, %11, %c0_i32_4 : i32
    scf.if %12 {
      %c0 = arith.constant 0 : index
      %c0_5 = arith.constant 0 : index
      %13 = vector.load %arg12[%c0, %c0_5] : memref<8x128xf32, #tpu.memory_space<vmem>>, vector<8x128xf32>
      %14 = vector.shape_cast %13 : vector<8x128xf32> to vector<1x8x128xf32>
      %c0_6 = arith.constant 0 : index
      %c0_7 = arith.constant 0 : index
      %c0_8 = arith.constant 0 : index
      %15 = vector.load %arg11[%c0_6, %c0_7, %c0_8] : memref<1x8x128xf32, #tpu.memory_space<vmem>>, vector<1x8x128xf32>
      tpu.vector_store %arg11[%c0_6, %c0_7, %c0_8], %14 {strides = array<i32>} : memref<1x8x128xf32, #tpu.memory_space<vmem>>, vector<1x8x128xf32>,
    } else {
    }
    return
  }
  func.func @transform_0(%arg0: i32, %arg1: i32, %arg2: memref<2xi32, #tpu.memory_space<smem>>, %arg3: memref<2xi32, #tpu.memory_space<smem>>, %arg4: memref<2xi32, #tpu.memory_space<smem>>) -> (i32, i32) {
    %c1_i32 = arith.constant 1 : i32
    %0 = arith.muli %arg0, %c1_i32 : i32
    %1 = arith.addi %0, %arg1 : i32
    %2 = arith.index_cast %1 : i32 to index
    %3 = memref.load %arg2[%2] : memref<2xi32, #tpu.memory_space<smem>>
    %c0_i32 = arith.constant 0 : i32
    %c0_i32_0 = arith.constant 0 : i32
    return %3, %c0_i32 : i32, i32
  }
  func.func @transform_1(%arg0: i32, %arg1: i32, %arg2: memref<2xi32, #tpu.memory_space<smem>>, %arg3: memref<2xi32, #tpu.memory_space<smem>>, %arg4: memref<2xi32, #tpu.memory_space<smem>>) -> (i32, i32) {
    %c1_i32 = arith.constant 1 : i32
    %0 = arith.muli %arg0, %c1_i32 : i32
    %1 = arith.addi %0, %arg1 : i32
    %2 = arith.index_cast %1 : i32 to index
    %3 = memref.load %arg3[%2] : memref<2xi32, #tpu.memory_space<smem>>
    %c0_i32 = arith.constant 0 : i32
    %c0_i32_0 = arith.constant 0 : i32
    return %3, %c0_i32 : i32, i32
  }
  func.func @transform_2(%arg0: i32, %arg1: i32, %arg2: memref<2xi32, #tpu.memory_space<smem>>, %arg3: memref<2xi32, #tpu.memory_space<smem>>, %arg4: memref<2xi32, #tpu.memory_space<smem>>) -> (i32, i32) {
    %c1_i32 = arith.constant 1 : i32
    %0 = arith.muli %arg0, %c1_i32 : i32
    %1 = arith.addi %0, %arg1 : i32
    %2 = arith.index_cast %1 : i32 to index
    %3 = memref.load %arg2[%2] : memref<2xi32, #tpu.memory_space<smem>>
    %c0_i32 = arith.constant 0 : i32
    %c0_i32_0 = arith.constant 0 : i32
    return %3, %c0_i32 : i32, i32
  }
  func.func @transform_3(%arg0: i32, %arg1: i32, %arg2: memref<2xi32, #tpu.memory_space<smem>>, %arg3: memref<2xi32, #tpu.memory_space<smem>>, %arg4: memref<2xi32, #tpu.memory_space<smem>>) -> (i32, i32) {
    %c1_i32 = arith.constant 1 : i32
    %0 = arith.muli %arg0, %c1_i32 : i32
    %1 = arith.addi %0, %arg1 : i32
    %2 = arith.index_cast %1 : i32 to index
    %3 = memref.load %arg3[%2] : memref<2xi32, #tpu.memory_space<smem>>
    %c0_i32 = arith.constant 0 : i32
    %c0_i32_0 = arith.constant 0 : i32
    return %c0_i32, %3 : i32, i32
  }
  func.func @transform_4(%arg0: i32, %arg1: i32, %arg2: memref<2xi32, #tpu.memory_space<smem>>, %arg3: memref<2xi32, #tpu.memory_space<smem>>, %arg4: memref<2xi32, #tpu.memory_space<smem>>) -> (i32, i32) {
    %c1_i32 = arith.constant 1 : i32
    %0 = arith.muli %arg0, %c1_i32 : i32
    %1 = arith.addi %0, %arg1 : i32
    %2 = arith.index_cast %1 : i32 to index
    %3 = memref.load %arg2[%2] : memref<2xi32, #tpu.memory_space<smem>>
    %c0_i32 = arith.constant 0 : i32
    %c0_i32_0 = arith.constant 0 : i32
    return %3, %c0_i32 : i32, i32
  }
  func.func @transform_5(%arg0: i32, %arg1: i32, %arg2: memref<2xi32, #tpu.memory_space<smem>>, %arg3: memref<2xi32, #tpu.memory_space<smem>>, %arg4: memref<2xi32, #tpu.memory_space<smem>>) -> (i32, i32) {
    %c1_i32 = arith.constant 1 : i32
    %0 = arith.muli %arg0, %c1_i32 : i32
    %1 = arith.addi %0, %arg1 : i32
    %2 = arith.index_cast %1 : i32 to index
    %3 = memref.load %arg3[%2] : memref<2xi32, #tpu.memory_space<smem>>
    %c0_i32 = arith.constant 0 : i32
    %c0_i32_0 = arith.constant 0 : i32
    return %c0_i32, %3 : i32, i32
  }
  func.func @transform_6(%arg0: i32, %arg1: i32, %arg2: memref<2xi32, #tpu.memory_space<smem>>, %arg3: memref<2xi32, #tpu.memory_space<smem>>, %arg4: memref<2xi32, #tpu.memory_space<smem>>) -> (i32, i32, i32) {
    %c0_i32 = arith.constant 0 : i32
    %c0_i32_0 = arith.constant 0 : i32
    %c0_i32_1 = arith.constant 0 : i32
    return %arg0, %c0_i32, %c0_i32_0 : i32, i32, i32
  }
}

</mosaic_0001>

<llo_original>
// kernel: tpu_custom_call.1
$region0: #{tpu_custom_call.1}
  #allocation0 [shape = 'u32[]', space=smem, size = 0x4, offset = 0x4, fixed_abs, tag = 'smem constant byte address 0x4 - core index']
  #allocation1 [shape = 'u32[72,128]{1,0:T(1,128)}', space=vmem, size = 0x9000, scoped, tag = 'internal scratch']
  #allocation2 [shape = 'f32[8,128]{1,0:T(8,128)}', space=vmem, size = 0x1000, scoped, tag = 'scratch operand']
  #allocation3 [shape = 's32[1]{0}', space=sflag, size = 0x4, scoped, tag = 'scoped memory for tpu_custom_call.1']
  #allocation4 [shape = 'u8[512]{0}', space=smem, size = 0x200, scoped, tag = 'prefetched SMEM operand 0']
  #allocation5 [shape = 'u8[512]{0}', space=smem, size = 0x200, scoped, tag = 'prefetched SMEM operand 1']
  #allocation6 [shape = 'u8[512]{0}', space=smem, size = 0x200, scoped, tag = 'prefetched SMEM operand 2']
  %s0 = inlined_call_operand.vmem [shape: s32[2], index: 0, kind: input, shape index: {}]
  %s1 = inlined_call_operand.vmem [shape: s32[2], index: 1, kind: input, shape index: {}]
  %s2 = inlined_call_operand.vmem [shape: s32[2], index: 2, kind: input, shape index: {}]
  %s3 = inlined_call_operand.vmem [shape: f32[128,32], index: 3, kind: input, shape index: {}]
  %s4 = inlined_call_operand.vmem [shape: f32[128,32], index: 4, kind: input, shape index: {}]
  %s5 = inlined_call_operand.vmem [shape: f32[128,1], index: 5, kind: input, shape index: {}]
  %s6 = inlined_call_operand.vmem [shape: f32[1,128], index: 6, kind: input, shape index: {}]
  %s7 = inlined_call_operand.vmem [shape: s32[128,1], index: 7, kind: input, shape index: {}]
  %s8 = inlined_call_operand.vmem [shape: s32[1,128], index: 8, kind: input, shape index: {}]
  %s9 = inlined_call_operand.hbm [shape: f32[2,8,128], index: 9, kind: output, shape index: {}]
  %s10 = sld [smem:[#allocation0]]
  $region77: #{tpu_custom_call.1} parent=0
    _
  %s12 = ssub.s32 1, %s10
  %s13 = scalar_select 0, %s12, %s10
  %s15 = sshll.u32 %s0, 4
  %s16 = int_to_ptr.vmem [resolvable:$true] %s15
  %18 = dma.vmem_to_smem %s16, 16, [#allocation4], [#allocation3]
  %s20 = sshll.u32 %s1, 4
  %s21 = int_to_ptr.vmem [resolvable:$true] %s20
  %23 = dma.vmem_to_smem %s21, 16, [#allocation5], [#allocation3]
  %s25 = sshll.u32 %s2, 4
  %s26 = int_to_ptr.vmem [resolvable:$true] %s25
  %28 = dma.vmem_to_smem %s26, 16, [#allocation6], [#allocation3]
  %30 = dma.done [#allocation3], 48
  %31 = sfence
  $region1: #{tpu_custom_call.1} parent=0
    #allocation7 [shape = 'u8[8192]{0}', space=vmem, size = 0x2000, scoped, tag = 'output window, operand 0']
    #allocation8 [shape = 's32[2]{0}', space=sflag, size = 0x8, scoped, tag = 'scoped memory for tpu_custom_call.1']
    %32 = vsyncpa [#allocation8], 0
    %s33 = scalar_lea.sflag [#allocation8], 1
    %34 = vsyncpa %s33, 0
    loop: start=0, step=1, limit=4
    $region2: #{tpu_custom_call.1} parent=1 // loop_pre_header
      _
    $region3: #{tpu_custom_call.1} parent=1 // loop_header
      %s36 = sphi 0, %s40
      %p37 = scmp.ge.s32.totalorder %s36, 4
      %s43 = sphi 0, %s55
      %s44 = sphi 0, %s51
      %s45 = sphi 0, %s43
      %s46 = sphi 0, %s44
      %s47 = sphi 0, %s45
      %s48 = sphi 0, %s46
      %s62 = sphi 0, %s64
      %s65 = sphi 0, %s62
      %s66 = sphi 0, %s65
      %s82 = sphi 0, %s66
      %s92 = sphi 0, %s94
      %s95 = sphi 0, %s92
      %s96 = sphi 0, %s95
      %s112 = sphi 0, %s96
      %s122 = sphi 0, %s124
      %s125 = sphi 0, %s122
      %s126 = sphi 0, %s125
      %s142 = sphi 0, %s126
      %s152 = sphi 0, %s154
      %s155 = sphi 0, %s152
      %s156 = sphi 0, %s155
      %s172 = sphi 0, %s156
      %s182 = sphi 0, %s184
      %s185 = sphi 0, %s182
      %s186 = sphi 0, %s185
      %s202 = sphi 0, %s186
      %s212 = sphi 0, %s214
      %s215 = sphi 0, %s212
      %s216 = sphi 0, %s215
      %s232 = sphi 0, %s216
      %s238 = sphi 0, %s240
      %s241 = sphi 0, %s238
      %s242 = sphi 0, %s241
      %s258 = sphi 0, %s242
    $region4: #{tpu_custom_call.1} parent=1 // loop_header_branch
      %39 = sbr.rel (%p37) target = $region8
    $region5: #{tpu_custom_call.1} parent=1 // loop_body
      %s41 = ssub.s32 %s36, 1
      %s42 = ssub.s32 %s36, 2
      %s49 = sadd.s32 1, %s44
      %p50 = scmp.ge.s32.totalorder %s49, 1
      %s51 = scalar_select %p50, 0, %s49
      %s52 = sadd.s32 1, %s43
      %s53 = scalar_select %p50, %s52, %s43
      %p54 = scmp.ge.s32.totalorder %s53, 2
      %s55 = scalar_select %p54, 0, %s53
      %s56 = sadd.s32 %s43, %s44
      %s57 = sld [smem:[#allocation4 + %s56]]
      %s58 = sadd.s32 %s55, %s51
      %s59 = sld [smem:[#allocation4 + %s58]]
      %s60 = ssub.s32 %s57, %s59
      %p61 = scmp.eq.s32.totalorder %s60, 0
      %s63 = sadd.s32 %s62, 1
      %s64 = scalar_select %p61, %s62, %s63
      %p67 = pneg %p61
      %p68 = scmp.eq.s32.totalorder %s36, 1
      %p69 = por %p67, %p68
      %p70 = scmp.ne.s32.totalorder %s62, %s65
      %p71 = scmp.eq.s32.totalorder %s36, 0
      %p72 = por %p70, %p71
      %p73 = scmp.ne.s32.totalorder %s62, %s65
      %p74 = scmp.eq.s32.totalorder %s41, 1
      %p75 = por %p73, %p74
      %p76 = scmp.ne.s32.totalorder %s65, %s66
      %p77 = scmp.eq.s32.totalorder %s41, 0
      %p78 = por %p76, %p77
      %p79 = scmp.ne.s32.totalorder %s65, %s66
      %p80 = scmp.eq.s32.totalorder %s42, 1
      %p81 = por %p79, %p80
      %p83 = scmp.ne.s32.totalorder %s66, %s82
      %p84 = scmp.eq.s32.totalorder %s42, 0
      %p85 = por %p83, %p84
      %s86 = sadd.s32 %s43, %s44
      %s87 = sld [smem:[#allocation5 + %s86]]
      %s88 = sadd.s32 %s55, %s51
      %s89 = sld [smem:[#allocation5 + %s88]]
      %s90 = ssub.s32 %s87, %s89
      %p91 = scmp.eq.s32.totalorder %s90, 0
      %s93 = sadd.s32 %s92, 1
      %s94 = scalar_select %p91, %s92, %s93
      %p97 = pneg %p91
      %p98 = scmp.eq.s32.totalorder %s36, 1
      %p99 = por %p97, %p98
      %p100 = scmp.ne.s32.totalorder %s92, %s95
      %p101 = scmp.eq.s32.totalorder %s36, 0
      %p102 = por %p100, %p101
      %p103 = scmp.ne.s32.totalorder %s92, %s95
      %p104 = scmp.eq.s32.totalorder %s41, 1
      %p105 = por %p103, %p104
      %p106 = scmp.ne.s32.totalorder %s95, %s96
      %p107 = scmp.eq.s32.totalorder %s41, 0
      %p108 = por %p106, %p107
      %p109 = scmp.ne.s32.totalorder %s95, %s96
      %p110 = scmp.eq.s32.totalorder %s42, 1
      %p111 = por %p109, %p110
      %p113 = scmp.ne.s32.totalorder %s96, %s112
      %p114 = scmp.eq.s32.totalorder %s42, 0
      %p115 = por %p113, %p114
      %s116 = sadd.s32 %s43, %s44
      %s117 = sld [smem:[#allocation4 + %s116]]
      %s118 = sadd.s32 %s55, %s51
      %s119 = sld [smem:[#allocation4 + %s118]]
      %s120 = ssub.s32 %s117, %s119
      %p121 = scmp.eq.s32.totalorder %s120, 0
      %s123 = sadd.s32 %s122, 1
      %s124 = scalar_select %p121, %s122, %s123
      %p127 = pneg %p121
      %p128 = scmp.eq.s32.totalorder %s36, 1
      %p129 = por %p127, %p128
      %p130 = scmp.ne.s32.totalorder %s122, %s125
      %p131 = scmp.eq.s32.totalorder %s36, 0
      %p132 = por %p130, %p131
      %p133 = scmp.ne.s32.totalorder %s122, %s125
      %p134 = scmp.eq.s32.totalorder %s41, 1
      %p135 = por %p133, %p134
      %p136 = scmp.ne.s32.totalorder %s125, %s126
      %p137 = scmp.eq.s32.totalorder %s41, 0
      %p138 = por %p136, %p137
      %p139 = scmp.ne.s32.totalorder %s125, %s126
      %p140 = scmp.eq.s32.totalorder %s42, 1
      %p141 = por %p139, %p140
      %p143 = scmp.ne.s32.totalorder %s126, %s142
      %p144 = scmp.eq.s32.totalorder %s42, 0
      %p145 = por %p143, %p144
      %s146 = sadd.s32 %s43, %s44
      %s147 = sld [smem:[#allocation5 + %s146]]
      %s148 = sadd.s32 %s55, %s51
      %s149 = sld [smem:[#allocation5 + %s148]]
      %s150 = ssub.s32 %s147, %s149
      %p151 = scmp.eq.s32.totalorder %s150, 0
      %s153 = sadd.s32 %s152, 1
      %s154 = scalar_select %p151, %s152, %s153
      %p157 = pneg %p151
      %p158 = scmp.eq.s32.totalorder %s36, 1
      %p159 = por %p157, %p158
      %p160 = scmp.ne.s32.totalorder %s152, %s155
      %p161 = scmp.eq.s32.totalorder %s36, 0
      %p162 = por %p160, %p161
      %p163 = scmp.ne.s32.totalorder %s152, %s155
      %p164 = scmp.eq.s32.totalorder %s41, 1
      %p165 = por %p163, %p164
      %p166 = scmp.ne.s32.totalorder %s155, %s156
      %p167 = scmp.eq.s32.totalorder %s41, 0
      %p168 = por %p166, %p167
      %p169 = scmp.ne.s32.totalorder %s155, %s156
      %p170 = scmp.eq.s32.totalorder %s42, 1
      %p171 = por %p169, %p170
      %p173 = scmp.ne.s32.totalorder %s156, %s172
      %p174 = scmp.eq.s32.totalorder %s42, 0
      %p175 = por %p173, %p174
      %s176 = sadd.s32 %s43, %s44
      %s177 = sld [smem:[#allocation4 + %s176]]
      %s178 = sadd.s32 %s55, %s51
      %s179 = sld [smem:[#allocation4 + %s178]]
      %s180 = ssub.s32 %s177, %s179
      %p181 = scmp.eq.s32.totalorder %s180, 0
      %s183 = sadd.s32 %s182, 1
      %s184 = scalar_select %p181, %s182, %s183
      %p187 = pneg %p181
      %p188 = scmp.eq.s32.totalorder %s36, 1
      %p189 = por %p187, %p188
      %p190 = scmp.ne.s32.totalorder %s182, %s185
      %p191 = scmp.eq.s32.totalorder %s36, 0
      %p192 = por %p190, %p191
      %p193 = scmp.ne.s32.totalorder %s182, %s185
      %p194 = scmp.eq.s32.totalorder %s41, 1
      %p195 = por %p193, %p194
      %p196 = scmp.ne.s32.totalorder %s185, %s186
      %p197 = scmp.eq.s32.totalorder %s41, 0
      %p198 = por %p196, %p197
      %p199 = scmp.ne.s32.totalorder %s185, %s186
      %p200 = scmp.eq.s32.totalorder %s42, 1
      %p201 = por %p199, %p200
      %p203 = scmp.ne.s32.totalorder %s186, %s202
      %p204 = scmp.eq.s32.totalorder %s42, 0
      %p205 = por %p203, %p204
      %s206 = sadd.s32 %s43, %s44
      %s207 = sld [smem:[#allocation5 + %s206]]
      %s208 = sadd.s32 %s55, %s51
      %s209 = sld [smem:[#allocation5 + %s208]]
      %s210 = ssub.s32 %s207, %s209
      %p211 = scmp.eq.s32.totalorder %s210, 0
      %s213 = sadd.s32 %s212, 1
      %s214 = scalar_select %p211, %s212, %s213
      %p217 = pneg %p211
      %p218 = scmp.eq.s32.totalorder %s36, 1
      %p219 = por %p217, %p218
      %p220 = scmp.ne.s32.totalorder %s212, %s215
      %p221 = scmp.eq.s32.totalorder %s36, 0
      %p222 = por %p220, %p221
      %p223 = scmp.ne.s32.totalorder %s212, %s215
      %p224 = scmp.eq.s32.totalorder %s41, 1
      %p225 = por %p223, %p224
      %p226 = scmp.ne.s32.totalorder %s215, %s216
      %p227 = scmp.eq.s32.totalorder %s41, 0
      %p228 = por %p226, %p227
      %p229 = scmp.ne.s32.totalorder %s215, %s216
      %p230 = scmp.eq.s32.totalorder %s42, 1
      %p231 = por %p229, %p230
      %p233 = scmp.ne.s32.totalorder %s216, %s232
      %p234 = scmp.eq.s32.totalorder %s42, 0
      %p235 = por %p233, %p234
      %s236 = ssub.s32 %s43, %s55
      %p237 = scmp.eq.s32.totalorder %s236, 0
      %s239 = sadd.s32 %s238, 1
      %s240 = scalar_select %p237, %s238, %s239
      %p243 = pneg %p237
      %p244 = scmp.eq.s32.totalorder %s36, 1
      %p245 = por %p243, %p244
      %p246 = scmp.ne.s32.totalorder %s238, %s241
      %p247 = scmp.eq.s32.totalorder %s36, 0
      %p248 = por %p246, %p247
      %p249 = scmp.ne.s32.totalorder %s238, %s241
      %p250 = scmp.eq.s32.totalorder %s41, 1
      %p251 = por %p249, %p250
      %p252 = scmp.ne.s32.totalorder %s241, %s242
      %p253 = scmp.eq.s32.totalorder %s41, 0
      %p254 = por %p252, %p253
      %p255 = scmp.ne.s32.totalorder %s241, %s242
      %p256 = scmp.eq.s32.totalorder %s42, 1
      %p257 = por %p255, %p256
      %p259 = scmp.ne.s32.totalorder %s242, %s258
      %p260 = scmp.eq.s32.totalorder %s42, 0
      %p261 = por %p259, %p260
      %p262 = scmp.le.s32.totalorder 1, %s36
      %p263 = scmp.lt.s32.totalorder %s36, 3
      %p264 = pnand %p262, %p263
      %p265 = pneg %p264
      // Predicated region
      $region9: #{tpu_custom_call.1} parent=5 // pred_check
        _
      $region10: #{tpu_custom_call.1} parent=5 // pred_check_branch
        %267 = sbr.rel (%p264) target = $region12
      $region11: #{tpu_custom_call.1} parent=5 // pred_region
        %s268 = ssub.s32 %s36, 1
      $region12: #{tpu_custom_call.1} parent=5 // pred_fallthru
        _
      %p269 = scmp.lt.s32.totalorder %s36, 2
      // Predicated region
      $region13: #{tpu_custom_call.1} parent=5 // pred_check
        %p270 = pneg %p269
      $region14: #{tpu_custom_call.1} parent=5 // pred_check_branch
        %272 = sbr.rel (%p270) target = $region16
      $region15: #{tpu_custom_call.1} parent=5 // pred_region
        // Predicated region
        $region17: #{tpu_custom_call.1} parent=15 // pred_check
          %p273 = pneg %p72
        $region18: #{tpu_custom_call.1} parent=15 // pred_check_branch
          %275 = sbr.rel (%p273) target = $region20
        $region19: #{tpu_custom_call.1} parent=15 // pred_region
          %s276 = sadd.s32 %s43, %s44
          %s277 = sld [smem:[#allocation4 + %s276]]
          %s278 = smul.u32 16, %s277
          %p279 = scmp.lt.s32.totalorder %s278, 15
          %s280 = scalar_select %p279, %s278, 15
          %s281 = smul.addr %s280, 8
          %s282 = scalar_lea.vmem %s3, %s281
          %s283 = sadd.s32 %s43, %s44
          %s284 = sld [smem:[#allocation4 + %s283]]
          %s285 = smul.u32 16, %s284
        $region20: #{tpu_custom_call.1} parent=15 // pred_fallthru
          _
        // Predicated region
        $region21: #{tpu_custom_call.1} parent=15 // pred_check
          %p286 = pneg %p102
        $region22: #{tpu_custom_call.1} parent=15 // pred_check_branch
          %288 = sbr.rel (%p286) target = $region24
        $region23: #{tpu_custom_call.1} parent=15 // pred_region
          %s289 = sadd.s32 %s43, %s44
          %s290 = sld [smem:[#allocation5 + %s289]]
          %s291 = smul.u32 16, %s290
          %p292 = scmp.lt.s32.totalorder %s291, 15
          %s293 = scalar_select %p292, %s291, 15
          %s294 = smul.addr %s293, 8
          %s295 = scalar_lea.vmem %s4, %s294
          %s296 = sadd.s32 %s43, %s44
          %s297 = sld [smem:[#allocation5 + %s296]]
          %s298 = smul.u32 16, %s297
        $region24: #{tpu_custom_call.1} parent=15 // pred_fallthru
          _
        // Predicated region
        $region25: #{tpu_custom_call.1} parent=15 // pred_check
          %p299 = pneg %p132
        $region26: #{tpu_custom_call.1} parent=15 // pred_check_branch
          %301 = sbr.rel (%p299) target = $region28
        $region27: #{tpu_custom_call.1} parent=15 // pred_region
          %s302 = sadd.s32 %s43, %s44
          %s303 = sld [smem:[#allocation4 + %s302]]
          %s304 = smul.u32 16, %s303
          %p305 = scmp.lt.s32.totalorder %s304, 15
          %s306 = scalar_select %p305, %s304, 15
          %s307 = smul.addr %s306, 8
          %s308 = scalar_lea.vmem %s5, %s307
          %s309 = sadd.s32 %s43, %s44
          %s310 = sld [smem:[#allocation4 + %s309]]
          %s311 = smul.u32 16, %s310
        $region28: #{tpu_custom_call.1} parent=15 // pred_fallthru
          _
        // Predicated region
        $region29: #{tpu_custom_call.1} parent=15 // pred_check
          %p312 = pneg %p162
        $region30: #{tpu_custom_call.1} parent=15 // pred_check_branch
          %314 = sbr.rel (%p312) target = $region32
        $region31: #{tpu_custom_call.1} parent=15 // pred_region
          %s315 = sadd.s32 %s43, %s44
          %s316 = sld [smem:[#allocation5 + %s315]]
          %p317 = scmp.lt.s32.totalorder %s316, 0
          %s318 = scalar_select %p317, %s316, 0
          %s319 = scalar_lea.vmem %s6, %s318
          %s320 = sadd.s32 %s43, %s44
          %s321 = sld [smem:[#allocation5 + %s320]]
        $region32: #{tpu_custom_call.1} parent=15 // pred_fallthru
          _
        // Predicated region
        $region33: #{tpu_custom_call.1} parent=15 // pred_check
          %p322 = pneg %p192
        $region34: #{tpu_custom_call.1} parent=15 // pred_check_branch
          %324 = sbr.rel (%p322) target = $region36
        $region35: #{tpu_custom_call.1} parent=15 // pred_region
          %s325 = sadd.s32 %s43, %s44
          %s326 = sld [smem:[#allocation4 + %s325]]
          %s327 = smul.u32 16, %s326
          %p328 = scmp.lt.s32.totalorder %s327, 15
          %s329 = scalar_select %p328, %s327, 15
          %s330 = smul.addr %s329, 8
          %s331 = scalar_lea.vmem %s7, %s330
          %s332 = sadd.s32 %s43, %s44
          %s333 = sld [smem:[#allocation4 + %s332]]
          %s334 = smul.u32 16, %s333
        $region36: #{tpu_custom_call.1} parent=15 // pred_fallthru
          _
        // Predicated region
        $region37: #{tpu_custom_call.1} parent=15 // pred_check
          %p335 = pneg %p222
        $region38: #{tpu_custom_call.1} parent=15 // pred_check_branch
          %337 = sbr.rel (%p335) target = $region40
        $region39: #{tpu_custom_call.1} parent=15 // pred_region
          %s338 = sadd.s32 %s43, %s44
          %s339 = sld [smem:[#allocation5 + %s338]]
          %p340 = scmp.lt.s32.totalorder %s339, 0
          %s341 = scalar_select %p340, %s339, 0
          %s342 = scalar_lea.vmem %s8, %s341
          %s343 = sadd.s32 %s43, %s44
          %s344 = sld [smem:[#allocation5 + %s343]]
        $region40: #{tpu_custom_call.1} parent=15 // pred_fallthru
          _
      $region16: #{tpu_custom_call.1} parent=5 // pred_fallthru
        _
      %p345 = scmp.le.s32.totalorder 1, %s36
      %p346 = scmp.lt.s32.totalorder %s36, 3
      %p347 = pnand %p345, %p346
      %p348 = pneg %p347
      // Predicated region
      $region41: #{tpu_custom_call.1} parent=5 // pred_check
        _
      $region42: #{tpu_custom_call.1} parent=5 // pred_check_branch
        %350 = sbr.rel (%p347) target = $region44
      $region43: #{tpu_custom_call.1} parent=5 // pred_region
        %s351 = ssub.s32 %s36, 1
        %s352 = sadd.s32 %s45, %s46
        %s353 = sld [smem:[#allocation4 + %s352]]
        %s354 = smul.u32 16, %s353
        %p355 = scmp.lt.s32.totalorder %s354, 15
        %s356 = scalar_select %p355, %s354, 15
        %s357 = smul.addr %s356, 8
        %s358 = scalar_lea.vmem %s3, %s357
        %p359 = pneg %p78
        %p360 = pneg %p75
        %s361 = sadd.s32 %s45, %s46
        %s362 = sld [smem:[#allocation5 + %s361]]
        %s363 = smul.u32 16, %s362
        %p364 = scmp.lt.s32.totalorder %s363, 15
        %s365 = scalar_select %p364, %s363, 15
        %s366 = smul.addr %s365, 8
        %s367 = scalar_lea.vmem %s4, %s366
        %p368 = pneg %p108
        %p369 = pneg %p105
        %s370 = sadd.s32 %s45, %s46
        %s371 = sld [smem:[#allocation4 + %s370]]
        %s372 = smul.u32 16, %s371
        %p373 = scmp.lt.s32.totalorder %s372, 15
        %s374 = scalar_select %p373, %s372, 15
        %s375 = smul.addr %s374, 8
        %s376 = scalar_lea.vmem %s5, %s375
        %p377 = pneg %p138
        %p378 = pneg %p135
        %s379 = sadd.s32 %s45, %s46
        %s380 = sld [smem:[#allocation5 + %s379]]
        %p381 = scmp.lt.s32.totalorder %s380, 0
        %s382 = scalar_select %p381, %s380, 0
        %s383 = scalar_lea.vmem %s6, %s382
        %p384 = pneg %p168
        %p385 = pneg %p165
        %s386 = sadd.s32 %s45, %s46
        %s387 = sld [smem:[#allocation4 + %s386]]
        %s388 = smul.u32 16, %s387
        %p389 = scmp.lt.s32.totalorder %s388, 15
        %s390 = scalar_select %p389, %s388, 15
        %s391 = smul.addr %s390, 8
        %s392 = scalar_lea.vmem %s7, %s391
        %p393 = pneg %p198
        %p394 = pneg %p195
        %s395 = sadd.s32 %s45, %s46
        %s396 = sld [smem:[#allocation5 + %s395]]
        %p397 = scmp.lt.s32.totalorder %s396, 0
        %s398 = scalar_select %p397, %s396, 0
        %s399 = scalar_lea.vmem %s8, %s398
        %p400 = pneg %p228
        %p401 = pneg %p225
        %p402 = pneg %p254
        %p403 = pneg %p251
        %s404 = sand.u32 %s241, 1
        %s405 = scalar_lea.sflag [#allocation8], %s404
        %s406 = sand.u32 %s241, 1
        %s407 = smul.addr %s406, 8
        %s408 = scalar_lea.vmem [#allocation7], %s407
        %s409 = sadd.s32 %s45, %s46
        %s410 = sld [smem:[#allocation4 + %s409]]
        %s411 = smul.u32 16, %s410
        %p412 = scmp.lt.s32.totalorder %s411, 15
        %s413 = scalar_select %p412, %s411, 15
        %s414 = smul.addr %s413, 8
        %s415 = scalar_lea.vmem %s3, %s414
        %s416 = sadd.s32 %s45, %s46
        %s417 = sld [smem:[#allocation4 + %s416]]
        %s418 = smul.u32 16, %s417
        %s419 = sadd.s32 %s45, %s46
        %s420 = sld [smem:[#allocation5 + %s419]]
        %s421 = smul.u32 16, %s420
        %p422 = scmp.lt.s32.totalorder %s421, 15
        %s423 = scalar_select %p422, %s421, 15
        %s424 = smul.addr %s423, 8
        %s425 = scalar_lea.vmem %s4, %s424
        %s426 = sadd.s32 %s45, %s46
        %s427 = sld [smem:[#allocation5 + %s426]]
        %s428 = smul.u32 16, %s427
        %s429 = sadd.s32 %s45, %s46
        %s430 = sld [smem:[#allocation4 + %s429]]
        %s431 = smul.u32 16, %s430
        %p432 = scmp.lt.s32.totalorder %s431, 15
        %s433 = scalar_select %p432, %s431, 15
        %s434 = smul.addr %s433, 8
        %s435 = scalar_lea.vmem %s5, %s434
        %s436 = sadd.s32 %s45, %s46
        %s437 = sld [smem:[#allocation4 + %s436]]
        %s438 = smul.u32 16, %s437
        %s439 = sadd.s32 %s45, %s46
        %s440 = sld [smem:[#allocation5 + %s439]]
        %p441 = scmp.lt.s32.totalorder %s440, 0
        %s442 = scalar_select %p441, %s440, 0
        %s443 = scalar_lea.vmem %s6, %s442
        %s444 = sadd.s32 %s45, %s46
        %s445 = sld [smem:[#allocation5 + %s444]]
        %s446 = sadd.s32 %s45, %s46
        %s447 = sld [smem:[#allocation4 + %s446]]
        %s448 = smul.u32 16, %s447
        %p449 = scmp.lt.s32.totalorder %s448, 15
        %s450 = scalar_select %p449, %s448, 15
        %s451 = smul.addr %s450, 8
        %s452 = scalar_lea.vmem %s7, %s451
        %s453 = sadd.s32 %s45, %s46
        %s454 = sld [smem:[#allocation4 + %s453]]
        %s455 = smul.u32 16, %s454
        %s456 = sadd.s32 %s45, %s46
        %s457 = sld [smem:[#allocation5 + %s456]]
        %p458 = scmp.lt.s32.totalorder %s457, 0
        %s459 = scalar_select %p458, %s457, 0
        %s460 = scalar_lea.vmem %s8, %s459
        %s461 = sadd.s32 %s45, %s46
        %s462 = sld [smem:[#allocation5 + %s461]]
        %s463 = sadd.s32 %s45, %s46
        %p464 = scmp.eq.s32.totalorder %s46, 0
        // Predicated region
        $region45: #{tpu_custom_call.1} parent=43 // pred_check
          %p465 = pneg %p464
        $region46: #{tpu_custom_call.1} parent=43 // pred_check_branch
          %467 = sbr.rel (%p465) target = $region48
        $region47: #{tpu_custom_call.1} parent=43 // pred_region
          %468 = vst [vmem:[#allocation2] sm:$0xff] 0.0
        $region48: #{tpu_custom_call.1} parent=43 // pred_fallthru
          _
        %s469 = sld [smem:[#allocation6 + %s463]]
        %p470 = scmp.eq.s32.totalorder %s469, 1
        // Predicated region
        $region49: #{tpu_custom_call.1} parent=43 // pred_check
          %p471 = pneg %p470
        $region50: #{tpu_custom_call.1} parent=43 // pred_check_branch
          %473 = sbr.rel (%p471) target = $region52
        $region51: #{tpu_custom_call.1} parent=43 // pred_region
          %s474 = sld [smem:[#allocation4 + %s463]]
          %s475 = sld [smem:[#allocation5 + %s463]]
          %v476 = vld [vmem:[%s415] sm:$0xff]
          %v477 = vld [vmem:[%s415 + $0x8] sm:$0xff]
          %v478 = vld [vmem:[%s415 + $0x10] sm:$0xff]
          %v479 = vld [vmem:[%s415 + $0x18] sm:$0xff]
          %v480 = vld [vmem:[%s415 + $0x20] sm:$0xff]
          %v481 = vld [vmem:[%s415 + $0x28] sm:$0xff]
          %v482 = vld [vmem:[%s415 + $0x30] sm:$0xff]
          %v483 = vld [vmem:[%s415 + $0x38] sm:$0xff]
          %v484 = vld [vmem:[%s415 + $0x40] sm:$0xff]
          %v485 = vld [vmem:[%s415 + $0x48] sm:$0xff]
          %v486 = vld [vmem:[%s415 + $0x50] sm:$0xff]
          %v487 = vld [vmem:[%s415 + $0x58] sm:$0xff]
          %v488 = vld [vmem:[%s415 + $0x60] sm:$0xff]
          %v489 = vld [vmem:[%s415 + $0x68] sm:$0xff]
          %v490 = vld [vmem:[%s415 + $0x70] sm:$0xff]
          %v491 = vld [vmem:[%s415 + $0x78] sm:$0xff]
          %v492 = vld [vmem:[%s425] sm:$0xff]
          %v493 = vld [vmem:[%s425 + $0x8] sm:$0xff]
          %v494 = vld [vmem:[%s425 + $0x10] sm:$0xff]
          %v495 = vld [vmem:[%s425 + $0x18] sm:$0xff]
          %v496 = vld [vmem:[%s425 + $0x20] sm:$0xff]
          %v497 = vld [vmem:[%s425 + $0x28] sm:$0xff]
          %v498 = vld [vmem:[%s425 + $0x30] sm:$0xff]
          %v499 = vld [vmem:[%s425 + $0x38] sm:$0xff]
          %v500 = vld [vmem:[%s425 + $0x40] sm:$0xff]
          %v501 = vld [vmem:[%s425 + $0x48] sm:$0xff]
          %v502 = vld [vmem:[%s425 + $0x50] sm:$0xff]
          %v503 = vld [vmem:[%s425 + $0x58] sm:$0xff]
          %v504 = vld [vmem:[%s425 + $0x60] sm:$0xff]
          %v505 = vld [vmem:[%s425 + $0x68] sm:$0xff]
          %v506 = vld [vmem:[%s425 + $0x70] sm:$0xff]
          %v507 = vld [vmem:[%s425 + $0x78] sm:$0xff]
          %vm508 = vcmask 261120
          %v510 = vsel %vm508, %v476, 0
          %v513 = vsel %vm508, %v477, 0
          %v516 = vsel %vm508, %v478, 0
          %v519 = vsel %vm508, %v479, 0
          %v522 = vsel %vm508, %v480, 0
          %v525 = vsel %vm508, %v481, 0
          %v528 = vsel %vm508, %v482, 0
          %v531 = vsel %vm508, %v483, 0
          %v534 = vsel %vm508, %v484, 0
          %v537 = vsel %vm508, %v485, 0
          %v540 = vsel %vm508, %v486, 0
          %v543 = vsel %vm508, %v487, 0
          %v546 = vsel %vm508, %v488, 0
          %v549 = vsel %vm508, %v489, 0
          %v552 = vsel %vm508, %v490, 0
          %v555 = vsel %vm508, %v491, 0
          %v558 = vsel %vm508, %v492, 0
          %v561 = vsel %vm508, %v493, 0
          %v564 = vsel %vm508, %v494, 0
          %v567 = vsel %vm508, %v495, 0
          %v570 = vsel %vm508, %v496, 0
          %v573 = vsel %vm508, %v497, 0
          %v576 = vsel %vm508, %v498, 0
          %v579 = vsel %vm508, %v499, 0
          %v582 = vsel %vm508, %v500, 0
          %v585 = vsel %vm508, %v501, 0
          %v588 = vsel %vm508, %v502, 0
          %v591 = vsel %vm508, %v503, 0
          %v594 = vsel %vm508, %v504, 0
          %v597 = vsel %vm508, %v505, 0
          %v600 = vsel %vm508, %v506, 0
          %v603 = vsel %vm508, %v507, 0
          %605 = vmatpush.xpose.msra.mxu0 %v603
          %606 = vmatpush.xpose.msra.mxu0 %v600
          %607 = vmatpush.xpose.msra.mxu0 %v597
          %608 = vmatpush.xpose.msra.mxu0 %v594
          %609 = vmatpush.xpose.msra.mxu0 %v591
          %610 = vmatpush.xpose.msra.mxu0 %v588
          %611 = vmatpush.xpose.msra.mxu0 %v585
          %612 = vmatpush.xpose.msra.mxu0 %v582
          %613 = vmatpush.xpose.msra.mxu0 %v579
          %614 = vmatpush.xpose.msra.mxu0 %v576
          %615 = vmatpush.xpose.msra.mxu0 %v573
          %616 = vmatpush.xpose.msra.mxu0 %v570
          %617 = vmatpush.xpose.msra.mxu0 %v567
          %618 = vmatpush.xpose.msra.mxu0 %v564
          %619 = vmatpush.xpose.msra.mxu0 %v561
          %620 = vmatpush.xpose.msra.mxu0 %v558
          %621 = vmatmul.f32.gmra.mxu0 %v510
          %v622 = vpop.f32.mrf.mxu0
          %v623 = vadd.f32 0.0, %v622
          %624 = vmatmul.f32.gmra.mxu0 %v513
          %v625 = vpop.f32.mrf.mxu0
          %v626 = vadd.f32 0.0, %v625
          %627 = vmatmul.f32.gmra.mxu0 %v516
          %v628 = vpop.f32.mrf.mxu0
          %v629 = vadd.f32 0.0, %v628
          %630 = vmatmul.f32.gmra.mxu0 %v519
          %v631 = vpop.f32.mrf.mxu0
          %v632 = vadd.f32 0.0, %v631
          %633 = vmatmul.f32.gmra.mxu0 %v522
          %v634 = vpop.f32.mrf.mxu0
          %v635 = vadd.f32 0.0, %v634
          %636 = vmatmul.f32.gmra.mxu0 %v525
          %v637 = vpop.f32.mrf.mxu0
          %v638 = vadd.f32 0.0, %v637
          %639 = vmatmul.f32.gmra.mxu0 %v528
          %v640 = vpop.f32.mrf.mxu0
          %v641 = vadd.f32 0.0, %v640
          %642 = vmatmul.f32.gmra.mxu0 %v531
          %v643 = vpop.f32.mrf.mxu0
          %v644 = vadd.f32 0.0, %v643
          %645 = vmatmul.f32.gmra.mxu0 %v534
          %v646 = vpop.f32.mrf.mxu0
          %v647 = vadd.f32 0.0, %v646
          %648 = vmatmul.f32.gmra.mxu0 %v537
          %v649 = vpop.f32.mrf.mxu0
          %v650 = vadd.f32 0.0, %v649
          %651 = vmatmul.f32.gmra.mxu0 %v540
          %v652 = vpop.f32.mrf.mxu0
          %v653 = vadd.f32 0.0, %v652
          %654 = vmatmul.f32.gmra.mxu0 %v543
          %v655 = vpop.f32.mrf.mxu0
          %v656 = vadd.f32 0.0, %v655
          %657 = vmatmul.f32.gmra.mxu0 %v546
          %v658 = vpop.f32.mrf.mxu0
          %v659 = vadd.f32 0.0, %v658
          %660 = vmatmul.f32.gmra.mxu0 %v549
          %v661 = vpop.f32.mrf.mxu0
          %v662 = vadd.f32 0.0, %v661
          %663 = vmatmul.f32.gmra.mxu0 %v552
          %v664 = vpop.f32.mrf.mxu0
          %v665 = vadd.f32 0.0, %v664
          %666 = vmatmul.f32.gmra.mxu0 %v555
          %v667 = vpop.f32.mrf.mxu0
          %v668 = vadd.f32 0.0, %v667
          %669 = vdwg.mxu0
          %v670 = vld [vmem:[%s435] sm:$0xff]
          %v671 = vld [vmem:[%s435 + $0x8] sm:$0xff]
          %v672 = vld [vmem:[%s435 + $0x10] sm:$0xff]
          %v673 = vld [vmem:[%s435 + $0x18] sm:$0xff]
          %v674 = vld [vmem:[%s435 + $0x20] sm:$0xff]
          %v675 = vld [vmem:[%s435 + $0x28] sm:$0xff]
          %v676 = vld [vmem:[%s435 + $0x30] sm:$0xff]
          %v677 = vld [vmem:[%s435 + $0x38] sm:$0xff]
          %v678 = vld [vmem:[%s435 + $0x40] sm:$0xff]
          %v679 = vld [vmem:[%s435 + $0x48] sm:$0xff]
          %v680 = vld [vmem:[%s435 + $0x50] sm:$0xff]
          %v681 = vld [vmem:[%s435 + $0x58] sm:$0xff]
          %v682 = vld [vmem:[%s435 + $0x60] sm:$0xff]
          %v683 = vld [vmem:[%s435 + $0x68] sm:$0xff]
          %v684 = vld [vmem:[%s435 + $0x70] sm:$0xff]
          %v685 = vld [vmem:[%s435 + $0x78] sm:$0xff]
          %v686 = vld [vmem:[%s443] sm:$0x1]
          %688 = vset.pattern.permute.xlu0 0
          %689 = vperm.xlu0 %688, %v670
          %v690 = vpop.permute.xlu0 %689
          %693 = vset.pattern.permute.xlu0 0
          %694 = vperm.xlu0 %693, %v671
          %v695 = vpop.permute.xlu0 %694
          %698 = vset.pattern.permute.xlu0 0
          %699 = vperm.xlu0 %698, %v672
          %v700 = vpop.permute.xlu0 %699
          %703 = vset.pattern.permute.xlu0 0
          %704 = vperm.xlu0 %703, %v673
          %v705 = vpop.permute.xlu0 %704
          %708 = vset.pattern.permute.xlu0 0
          %709 = vperm.xlu0 %708, %v674
          %v710 = vpop.permute.xlu0 %709
          %713 = vset.pattern.permute.xlu0 0
          %714 = vperm.xlu0 %713, %v675
          %v715 = vpop.permute.xlu0 %714
          %718 = vset.pattern.permute.xlu0 0
          %719 = vperm.xlu0 %718, %v676
          %v720 = vpop.permute.xlu0 %719
          %723 = vset.pattern.permute.xlu0 0
          %724 = vperm.xlu0 %723, %v677
          %v725 = vpop.permute.xlu0 %724
          %728 = vset.pattern.permute.xlu0 0
          %729 = vperm.xlu0 %728, %v678
          %v730 = vpop.permute.xlu0 %729
          %733 = vset.pattern.permute.xlu0 0
          %734 = vperm.xlu0 %733, %v679
          %v735 = vpop.permute.xlu0 %734
          %738 = vset.pattern.permute.xlu0 0
          %739 = vperm.xlu0 %738, %v680
          %v740 = vpop.permute.xlu0 %739
          %743 = vset.pattern.permute.xlu0 0
          %744 = vperm.xlu0 %743, %v681
          %v745 = vpop.permute.xlu0 %744
          %748 = vset.pattern.permute.xlu0 0
          %749 = vperm.xlu0 %748, %v682
          %v750 = vpop.permute.xlu0 %749
          %753 = vset.pattern.permute.xlu0 0
          %754 = vperm.xlu0 %753, %v683
          %v755 = vpop.permute.xlu0 %754
          %758 = vset.pattern.permute.xlu0 0
          %759 = vperm.xlu0 %758, %v684
          %v760 = vpop.permute.xlu0 %759
          %763 = vset.pattern.permute.xlu0 0
          %764 = vperm.xlu0 %763, %v685
          %v765 = vpop.permute.xlu0 %764
          %v768 = vperm.slane %v686, 0
          %v770 = vadd.f32 %v690, %v768
          %v771 = vadd.f32 %v695, %v768
          %v772 = vadd.f32 %v700, %v768
          %v773 = vadd.f32 %v705, %v768
          %v774 = vadd.f32 %v710, %v768
          %v775 = vadd.f32 %v715, %v768
          %v776 = vadd.f32 %v720, %v768
          %v777 = vadd.f32 %v725, %v768
          %v778 = vadd.f32 %v730, %v768
          %v779 = vadd.f32 %v735, %v768
          %v780 = vadd.f32 %v740, %v768
          %v781 = vadd.f32 %v745, %v768
          %v782 = vadd.f32 %v750, %v768
          %v783 = vadd.f32 %v755, %v768
          %v784 = vadd.f32 %v760, %v768
          %v785 = vadd.f32 %v765, %v768
          %v786 = vmul.f32 %v623, 2.0
          %v787 = vmul.f32 %v626, 2.0
          %v788 = vmul.f32 %v629, 2.0
          %v789 = vmul.f32 %v632, 2.0
          %v790 = vmul.f32 %v635, 2.0
          %v791 = vmul.f32 %v638, 2.0
          %v792 = vmul.f32 %v641, 2.0
          %v793 = vmul.f32 %v644, 2.0
          %v794 = vmul.f32 %v647, 2.0
          %v795 = vmul.f32 %v650, 2.0
          %v796 = vmul.f32 %v653, 2.0
          %v797 = vmul.f32 %v656, 2.0
          %v798 = vmul.f32 %v659, 2.0
          %v799 = vmul.f32 %v662, 2.0
          %v800 = vmul.f32 %v665, 2.0
          %v801 = vmul.f32 %v668, 2.0
          %v802 = vsub.f32 %v770, %v786
          %v803 = vsub.f32 %v771, %v787
          %v804 = vsub.f32 %v772, %v788
          %v805 = vsub.f32 %v773, %v789
          %v806 = vsub.f32 %v774, %v790
          %v807 = vsub.f32 %v775, %v791
          %v808 = vsub.f32 %v776, %v792
          %v809 = vsub.f32 %v777, %v793
          %v810 = vsub.f32 %v778, %v794
          %v811 = vsub.f32 %v779, %v795
          %v812 = vsub.f32 %v780, %v796
          %v813 = vsub.f32 %v781, %v797
          %v814 = vsub.f32 %v782, %v798
          %v815 = vsub.f32 %v783, %v799
          %v816 = vsub.f32 %v784, %v800
          %v817 = vsub.f32 %v785, %v801
          %v818 = vmax.f32 %v802, 0.0
          %v819 = vmax.f32 %v803, 0.0
          %v820 = vmax.f32 %v804, 0.0
          %v821 = vmax.f32 %v805, 0.0
          %v822 = vmax.f32 %v806, 0.0
          %v823 = vmax.f32 %v807, 0.0
          %v824 = vmax.f32 %v808, 0.0
          %v825 = vmax.f32 %v809, 0.0
          %v826 = vmax.f32 %v810, 0.0
          %v827 = vmax.f32 %v811, 0.0
          %v828 = vmax.f32 %v812, 0.0
          %v829 = vmax.f32 %v813, 0.0
          %v830 = vmax.f32 %v814, 0.0
          %v831 = vmax.f32 %v815, 0.0
          %v832 = vmax.f32 %v816, 0.0
          %v833 = vmax.f32 %v817, 0.0
          %v834 = vrsqrt.pop %v818
          %v835 = vmul.f32 %v834, %v818
          %v836 = vmul.f32 %v835, %v834
          %v837 = vmul.f32 0.5, %v836
          %v838 = vsub.f32 1.5, %v837
          %v839 = vmul.f32 %v834, %v838
          %v840 = vmul.f32 %v818, %v839
          %vm841 = vcmp.eq.f32.partialorder %v818, inf
          %v842 = vsel %vm841, %v818, %v840
          %vm843 = vcmp.eq.f32.partialorder %v818, 0.0
          %v844 = vand.u32 %v818, 2147483648
          %v845 = vsel %vm843, %v844, %v842
          %v846 = vrsqrt.pop %v819
          %v847 = vmul.f32 %v846, %v819
          %v848 = vmul.f32 %v847, %v846
          %v849 = vmul.f32 0.5, %v848
          %v850 = vsub.f32 1.5, %v849
          %v851 = vmul.f32 %v846, %v850
          %v852 = vmul.f32 %v819, %v851
          %vm853 = vcmp.eq.f32.partialorder %v819, inf
          %v854 = vsel %vm853, %v819, %v852
          %vm855 = vcmp.eq.f32.partialorder %v819, 0.0
          %v856 = vand.u32 %v819, 2147483648
          %v857 = vsel %vm855, %v856, %v854
          %v858 = vrsqrt.pop %v820
          %v859 = vmul.f32 %v858, %v820
          %v860 = vmul.f32 %v859, %v858
          %v861 = vmul.f32 0.5, %v860
          %v862 = vsub.f32 1.5, %v861
          %v863 = vmul.f32 %v858, %v862
          %v864 = vmul.f32 %v820, %v863
          %vm865 = vcmp.eq.f32.partialorder %v820, inf
          %v866 = vsel %vm865, %v820, %v864
          %vm867 = vcmp.eq.f32.partialorder %v820, 0.0
          %v868 = vand.u32 %v820, 2147483648
          %v869 = vsel %vm867, %v868, %v866
          %v870 = vrsqrt.pop %v821
          %v871 = vmul.f32 %v870, %v821
          %v872 = vmul.f32 %v871, %v870
          %v873 = vmul.f32 0.5, %v872
          %v874 = vsub.f32 1.5, %v873
          %v875 = vmul.f32 %v870, %v874
          %v876 = vmul.f32 %v821, %v875
          %vm877 = vcmp.eq.f32.partialorder %v821, inf
          %v878 = vsel %vm877, %v821, %v876
          %vm879 = vcmp.eq.f32.partialorder %v821, 0.0
          %v880 = vand.u32 %v821, 2147483648
          %v881 = vsel %vm879, %v880, %v878
          %v882 = vrsqrt.pop %v822
          %v883 = vmul.f32 %v882, %v822
          %v884 = vmul.f32 %v883, %v882
          %v885 = vmul.f32 0.5, %v884
          %v886 = vsub.f32 1.5, %v885
          %v887 = vmul.f32 %v882, %v886
          %v888 = vmul.f32 %v822, %v887
          %vm889 = vcmp.eq.f32.partialorder %v822, inf
          %v890 = vsel %vm889, %v822, %v888
          %vm891 = vcmp.eq.f32.partialorder %v822, 0.0
          %v892 = vand.u32 %v822, 2147483648
          %v893 = vsel %vm891, %v892, %v890
          %v894 = vrsqrt.pop %v823
          %v895 = vmul.f32 %v894, %v823
          %v896 = vmul.f32 %v895, %v894
          %v897 = vmul.f32 0.5, %v896
          %v898 = vsub.f32 1.5, %v897
          %v899 = vmul.f32 %v894, %v898
          %v900 = vmul.f32 %v823, %v899
          %vm901 = vcmp.eq.f32.partialorder %v823, inf
          %v902 = vsel %vm901, %v823, %v900
          %vm903 = vcmp.eq.f32.partialorder %v823, 0.0
          %v904 = vand.u32 %v823, 2147483648
          %v905 = vsel %vm903, %v904, %v902
          %v906 = vrsqrt.pop %v824
          %v907 = vmul.f32 %v906, %v824
          %v908 = vmul.f32 %v907, %v906
          %v909 = vmul.f32 0.5, %v908
          %v910 = vsub.f32 1.5, %v909
          %v911 = vmul.f32 %v906, %v910
          %v912 = vmul.f32 %v824, %v911
          %vm913 = vcmp.eq.f32.partialorder %v824, inf
          %v914 = vsel %vm913, %v824, %v912
          %vm915 = vcmp.eq.f32.partialorder %v824, 0.0
          %v916 = vand.u32 %v824, 2147483648
          %v917 = vsel %vm915, %v916, %v914
          %v918 = vrsqrt.pop %v825
          %v919 = vmul.f32 %v918, %v825
          %v920 = vmul.f32 %v919, %v918
          %v921 = vmul.f32 0.5, %v920
          %v922 = vsub.f32 1.5, %v921
          %v923 = vmul.f32 %v918, %v922
          %v924 = vmul.f32 %v825, %v923
          %vm925 = vcmp.eq.f32.partialorder %v825, inf
          %v926 = vsel %vm925, %v825, %v924
          %vm927 = vcmp.eq.f32.partialorder %v825, 0.0
          %v928 = vand.u32 %v825, 2147483648
          %v929 = vsel %vm927, %v928, %v926
          %v930 = vrsqrt.pop %v826
          %v931 = vmul.f32 %v930, %v826
          %v932 = vmul.f32 %v931, %v930
          %v933 = vmul.f32 0.5, %v932
          %v934 = vsub.f32 1.5, %v933
          %v935 = vmul.f32 %v930, %v934
          %v936 = vmul.f32 %v826, %v935
          %vm937 = vcmp.eq.f32.partialorder %v826, inf
          %v938 = vsel %vm937, %v826, %v936
          %vm939 = vcmp.eq.f32.partialorder %v826, 0.0
          %v940 = vand.u32 %v826, 2147483648
          %v941 = vsel %vm939, %v940, %v938
          %v942 = vrsqrt.pop %v827
          %v943 = vmul.f32 %v942, %v827
          %v944 = vmul.f32 %v943, %v942
          %v945 = vmul.f32 0.5, %v944
          %v946 = vsub.f32 1.5, %v945
          %v947 = vmul.f32 %v942, %v946
          %v948 = vmul.f32 %v827, %v947
          %vm949 = vcmp.eq.f32.partialorder %v827, inf
          %v950 = vsel %vm949, %v827, %v948
          %vm951 = vcmp.eq.f32.partialorder %v827, 0.0
          %v952 = vand.u32 %v827, 2147483648
          %v953 = vsel %vm951, %v952, %v950
          %v954 = vrsqrt.pop %v828
          %v955 = vmul.f32 %v954, %v828
          %v956 = vmul.f32 %v955, %v954
          %v957 = vmul.f32 0.5, %v956
          %v958 = vsub.f32 1.5, %v957
          %v959 = vmul.f32 %v954, %v958
          %v960 = vmul.f32 %v828, %v959
          %vm961 = vcmp.eq.f32.partialorder %v828, inf
          %v962 = vsel %vm961, %v828, %v960
          %vm963 = vcmp.eq.f32.partialorder %v828, 0.0
          %v964 = vand.u32 %v828, 2147483648
          %v965 = vsel %vm963, %v964, %v962
          %v966 = vrsqrt.pop %v829
          %v967 = vmul.f32 %v966, %v829
          %v968 = vmul.f32 %v967, %v966
          %v969 = vmul.f32 0.5, %v968
          %v970 = vsub.f32 1.5, %v969
          %v971 = vmul.f32 %v966, %v970
          %v972 = vmul.f32 %v829, %v971
          %vm973 = vcmp.eq.f32.partialorder %v829, inf
          %v974 = vsel %vm973, %v829, %v972
          %vm975 = vcmp.eq.f32.partialorder %v829, 0.0
          %v976 = vand.u32 %v829, 2147483648
          %v977 = vsel %vm975, %v976, %v974
          %v978 = vrsqrt.pop %v830
          %v979 = vmul.f32 %v978, %v830
          %v980 = vmul.f32 %v979, %v978
          %v981 = vmul.f32 0.5, %v980
          %v982 = vsub.f32 1.5, %v981
          %v983 = vmul.f32 %v978, %v982
          %v984 = vmul.f32 %v830, %v983
          %vm985 = vcmp.eq.f32.partialorder %v830, inf
          %v986 = vsel %vm985, %v830, %v984
          %vm987 = vcmp.eq.f32.partialorder %v830, 0.0
          %v988 = vand.u32 %v830, 2147483648
          %v989 = vsel %vm987, %v988, %v986
          %v990 = vrsqrt.pop %v831
          %v991 = vmul.f32 %v990, %v831
          %v992 = vmul.f32 %v991, %v990
          %v993 = vmul.f32 0.5, %v992
          %v994 = vsub.f32 1.5, %v993
          %v995 = vmul.f32 %v990, %v994
          %v996 = vmul.f32 %v831, %v995
          %vm997 = vcmp.eq.f32.partialorder %v831, inf
          %v998 = vsel %vm997, %v831, %v996
          %vm999 = vcmp.eq.f32.partialorder %v831, 0.0
          %v1000 = vand.u32 %v831, 2147483648
          %v1001 = vsel %vm999, %v1000, %v998
          %v1002 = vrsqrt.pop %v832
          %v1003 = vmul.f32 %v1002, %v832
          %v1004 = vmul.f32 %v1003, %v1002
          %v1005 = vmul.f32 0.5, %v1004
          %v1006 = vsub.f32 1.5, %v1005
          %v1007 = vmul.f32 %v1002, %v1006
          %v1008 = vmul.f32 %v832, %v1007
          %vm1009 = vcmp.eq.f32.partialorder %v832, inf
          %v1010 = vsel %vm1009, %v832, %v1008
          %vm1011 = vcmp.eq.f32.partialorder %v832, 0.0
          %v1012 = vand.u32 %v832, 2147483648
          %v1013 = vsel %vm1011, %v1012, %v1010
          %v1014 = vrsqrt.pop %v833
          %v1015 = vmul.f32 %v1014, %v833
          %v1016 = vmul.f32 %v1015, %v1014
          %v1017 = vmul.f32 0.5, %v1016
          %v1018 = vsub.f32 1.5, %v1017
          %v1019 = vmul.f32 %v1014, %v1018
          %v1020 = vmul.f32 %v833, %v1019
          %vm1021 = vcmp.eq.f32.partialorder %v833, inf
          %v1022 = vsel %vm1021, %v833, %v1020
          %vm1023 = vcmp.eq.f32.partialorder %v833, 0.0
          %v1024 = vand.u32 %v833, 2147483648
          %v1025 = vsel %vm1023, %v1024, %v1022
          %v1026 = vsub.f32 1.0, %v845
          %v1027 = vsub.f32 1.0, %v857
          %v1028 = vsub.f32 1.0, %v869
          %v1029 = vsub.f32 1.0, %v881
          %v1030 = vsub.f32 1.0, %v893
          %v1031 = vsub.f32 1.0, %v905
          %v1032 = vsub.f32 1.0, %v917
          %v1033 = vsub.f32 1.0, %v929
          %v1034 = vsub.f32 1.0, %v941
          %v1035 = vsub.f32 1.0, %v953
          %v1036 = vsub.f32 1.0, %v965
          %v1037 = vsub.f32 1.0, %v977
          %v1038 = vsub.f32 1.0, %v989
          %v1039 = vsub.f32 1.0, %v1001
          %v1040 = vsub.f32 1.0, %v1013
          %v1041 = vsub.f32 1.0, %v1025
          %v1042 = vmax.f32 %v1026, 0.0
          %v1043 = vmax.f32 %v1027, 0.0
          %v1044 = vmax.f32 %v1028, 0.0
          %v1045 = vmax.f32 %v1029, 0.0
          %v1046 = vmax.f32 %v1030, 0.0
          %v1047 = vmax.f32 %v1031, 0.0
          %v1048 = vmax.f32 %v1032, 0.0
          %v1049 = vmax.f32 %v1033, 0.0
          %v1050 = vmax.f32 %v1034, 0.0
          %v1051 = vmax.f32 %v1035, 0.0
          %v1052 = vmax.f32 %v1036, 0.0
          %v1053 = vmax.f32 %v1037, 0.0
          %v1054 = vmax.f32 %v1038, 0.0
          %v1055 = vmax.f32 %v1039, 0.0
          %v1056 = vmax.f32 %v1040, 0.0
          %v1057 = vmax.f32 %v1041, 0.0
          %v1058 = vld [vmem:[%s452] sm:$0xff]
          %v1059 = vld [vmem:[%s452 + $0x8] sm:$0xff]
          %v1060 = vld [vmem:[%s452 + $0x10] sm:$0xff]
          %v1061 = vld [vmem:[%s452 + $0x18] sm:$0xff]
          %v1062 = vld [vmem:[%s452 + $0x20] sm:$0xff]
          %v1063 = vld [vmem:[%s452 + $0x28] sm:$0xff]
          %v1064 = vld [vmem:[%s452 + $0x30] sm:$0xff]
          %v1065 = vld [vmem:[%s452 + $0x38] sm:$0xff]
          %v1066 = vld [vmem:[%s452 + $0x40] sm:$0xff]
          %v1067 = vld [vmem:[%s452 + $0x48] sm:$0xff]
          %v1068 = vld [vmem:[%s452 + $0x50] sm:$0xff]
          %v1069 = vld [vmem:[%s452 + $0x58] sm:$0xff]
          %v1070 = vld [vmem:[%s452 + $0x60] sm:$0xff]
          %v1071 = vld [vmem:[%s452 + $0x68] sm:$0xff]
          %v1072 = vld [vmem:[%s452 + $0x70] sm:$0xff]
          %v1073 = vld [vmem:[%s452 + $0x78] sm:$0xff]
          %v1074 = vld [vmem:[%s460] sm:$0x1]
          %1075 = vset.pattern.permute.xlu0 0
          %1076 = vperm.xlu0 %1075, %v1058
          %v1077 = vpop.permute.xlu0 %1076
          %1078 = vset.pattern.permute.xlu0 0
          %1079 = vperm.xlu0 %1078, %v1059
          %v1080 = vpop.permute.xlu0 %1079
          %1081 = vset.pattern.permute.xlu0 0
          %1082 = vperm.xlu0 %1081, %v1060
          %v1083 = vpop.permute.xlu0 %1082
          %1084 = vset.pattern.permute.xlu0 0
          %1085 = vperm.xlu0 %1084, %v1061
          %v1086 = vpop.permute.xlu0 %1085
          %1087 = vset.pattern.permute.xlu0 0
          %1088 = vperm.xlu0 %1087, %v1062
          %v1089 = vpop.permute.xlu0 %1088
          %1090 = vset.pattern.permute.xlu0 0
          %1091 = vperm.xlu0 %1090, %v1063
          %v1092 = vpop.permute.xlu0 %1091
          %1093 = vset.pattern.permute.xlu0 0
          %1094 = vperm.xlu0 %1093, %v1064
          %v1095 = vpop.permute.xlu0 %1094
          %1096 = vset.pattern.permute.xlu0 0
          %1097 = vperm.xlu0 %1096, %v1065
          %v1098 = vpop.permute.xlu0 %1097
          %1099 = vset.pattern.permute.xlu0 0
          %1100 = vperm.xlu0 %1099, %v1066
          %v1101 = vpop.permute.xlu0 %1100
          %1102 = vset.pattern.permute.xlu0 0
          %1103 = vperm.xlu0 %1102, %v1067
          %v1104 = vpop.permute.xlu0 %1103
          %1105 = vset.pattern.permute.xlu0 0
          %1106 = vperm.xlu0 %1105, %v1068
          %v1107 = vpop.permute.xlu0 %1106
          %1108 = vset.pattern.permute.xlu0 0
          %1109 = vperm.xlu0 %1108, %v1069
          %v1110 = vpop.permute.xlu0 %1109
          %1111 = vset.pattern.permute.xlu0 0
          %1112 = vperm.xlu0 %1111, %v1070
          %v1113 = vpop.permute.xlu0 %1112
          %1114 = vset.pattern.permute.xlu0 0
          %1115 = vperm.xlu0 %1114, %v1071
          %v1116 = vpop.permute.xlu0 %1115
          %1117 = vset.pattern.permute.xlu0 0
          %1118 = vperm.xlu0 %1117, %v1072
          %v1119 = vpop.permute.xlu0 %1118
          %1120 = vset.pattern.permute.xlu0 0
          %1121 = vperm.xlu0 %1120, %v1073
          %v1122 = vpop.permute.xlu0 %1121
          %v1123 = vperm.slane %v1074, 0
          %vm1124 = vcmp.eq.s32.totalorder %v1077, %v1123
          %vm1125 = vcmp.eq.s32.totalorder %v1080, %v1123
          %vm1126 = vcmp.eq.s32.totalorder %v1083, %v1123
          %vm1127 = vcmp.eq.s32.totalorder %v1086, %v1123
          %vm1128 = vcmp.eq.s32.totalorder %v1089, %v1123
          %vm1129 = vcmp.eq.s32.totalorder %v1092, %v1123
          %vm1130 = vcmp.eq.s32.totalorder %v1095, %v1123
          %vm1131 = vcmp.eq.s32.totalorder %v1098, %v1123
          %vm1132 = vcmp.eq.s32.totalorder %v1101, %v1123
          %vm1133 = vcmp.eq.s32.totalorder %v1104, %v1123
          %vm1134 = vcmp.eq.s32.totalorder %v1107, %v1123
          %vm1135 = vcmp.eq.s32.totalorder %v1110, %v1123
          %vm1136 = vcmp.eq.s32.totalorder %v1113, %v1123
          %vm1137 = vcmp.eq.s32.totalorder %v1116, %v1123
          %vm1138 = vcmp.eq.s32.totalorder %v1119, %v1123
          %vm1139 = vcmp.eq.s32.totalorder %v1122, %v1123
          %v1140 = vmul.f32 %v1042, %v1042
          %v1141 = vmul.f32 %v1043, %v1043
          %v1142 = vmul.f32 %v1044, %v1044
          %v1143 = vmul.f32 %v1045, %v1045
          %v1144 = vmul.f32 %v1046, %v1046
          %v1145 = vmul.f32 %v1047, %v1047
          %v1146 = vmul.f32 %v1048, %v1048
          %v1147 = vmul.f32 %v1049, %v1049
          %v1148 = vmul.f32 %v1050, %v1050
          %v1149 = vmul.f32 %v1051, %v1051
          %v1150 = vmul.f32 %v1052, %v1052
          %v1151 = vmul.f32 %v1053, %v1053
          %v1152 = vmul.f32 %v1054, %v1054
          %v1153 = vmul.f32 %v1055, %v1055
          %v1154 = vmul.f32 %v1056, %v1056
          %v1155 = vmul.f32 %v1057, %v1057
          %v1156 = vsel %vm1124, %v818, %v1140
          %v1157 = vsel %vm1125, %v819, %v1141
          %v1158 = vsel %vm1126, %v820, %v1142
          %v1159 = vsel %vm1127, %v821, %v1143
          %v1160 = vsel %vm1128, %v822, %v1144
          %v1161 = vsel %vm1129, %v823, %v1145
          %v1162 = vsel %vm1130, %v824, %v1146
          %v1163 = vsel %vm1131, %v825, %v1147
          %v1164 = vsel %vm1132, %v826, %v1148
          %v1165 = vsel %vm1133, %v827, %v1149
          %v1166 = vsel %vm1134, %v828, %v1150
          %v1167 = vsel %vm1135, %v829, %v1151
          %v1168 = vsel %vm1136, %v830, %v1152
          %v1169 = vsel %vm1137, %v831, %v1153
          %v1170 = vsel %vm1138, %v832, %v1154
          %v1171 = vsel %vm1139, %v833, %v1155
          %p1172 = scmp.eq.s32.totalorder %s474, %s475
          // Predicated region
          $region53: #{tpu_custom_call.1} parent=51 // pred_check
            %p1173 = pneg %p1172
          $region54: #{tpu_custom_call.1} parent=51 // pred_check_branch
            %1175 = sbr.rel (%p1173) target = $region56
          $region55: #{tpu_custom_call.1} parent=51 // pred_region
            %v1176 = vlaneseq
            %v1177 = vshrl.u32 %v1176, 7
            %v1178 = vadd.s32 %v1177, 8
            %v1179 = vadd.s32 %v1177, 16
            %v1180 = vadd.s32 %v1177, 24
            %v1181 = vadd.s32 %v1177, 32
            %v1182 = vadd.s32 %v1177, 40
            %v1183 = vadd.s32 %v1177, 48
            %v1184 = vadd.s32 %v1177, 56
            %v1185 = vadd.s32 %v1177, 64
            %v1186 = vadd.s32 %v1177, 72
            %v1187 = vadd.s32 %v1177, 80
            %v1188 = vadd.s32 %v1177, 88
            %v1189 = vadd.s32 %v1177, 96
            %v1190 = vadd.s32 %v1177, 104
            %v1191 = vadd.s32 %v1177, 112
            %v1192 = vadd.s32 %v1177, 120
            %v1193 = vlaneseq
            %v1194 = vand.u32 %v1193, 127
            %vm1195 = vcmp.lt.s32.totalorder %v1177, %v1194
            %vm1196 = vcmp.lt.s32.totalorder %v1178, %v1194
            %vm1197 = vcmp.lt.s32.totalorder %v1179, %v1194
            %vm1198 = vcmp.lt.s32.totalorder %v1180, %v1194
            %vm1199 = vcmp.lt.s32.totalorder %v1181, %v1194
            %vm1200 = vcmp.lt.s32.totalorder %v1182, %v1194
            %vm1201 = vcmp.lt.s32.totalorder %v1183, %v1194
            %vm1202 = vcmp.lt.s32.totalorder %v1184, %v1194
            %vm1203 = vcmp.lt.s32.totalorder %v1185, %v1194
            %vm1204 = vcmp.lt.s32.totalorder %v1186, %v1194
            %vm1205 = vcmp.lt.s32.totalorder %v1187, %v1194
            %vm1206 = vcmp.lt.s32.totalorder %v1188, %v1194
            %vm1207 = vcmp.lt.s32.totalorder %v1189, %v1194
            %vm1208 = vcmp.lt.s32.totalorder %v1190, %v1194
            %vm1209 = vcmp.lt.s32.totalorder %v1191, %v1194
            %vm1210 = vcmp.lt.s32.totalorder %v1192, %v1194
            %v1211 = vsel %vm1195, %v1156, 0.0
            %v1212 = vsel %vm1196, %v1157, 0.0
            %v1213 = vsel %vm1197, %v1158, 0.0
            %v1214 = vsel %vm1198, %v1159, 0.0
            %v1215 = vsel %vm1199, %v1160, 0.0
            %v1216 = vsel %vm1200, %v1161, 0.0
            %v1217 = vsel %vm1201, %v1162, 0.0
            %v1218 = vsel %vm1202, %v1163, 0.0
            %v1219 = vsel %vm1203, %v1164, 0.0
            %v1220 = vsel %vm1204, %v1165, 0.0
            %v1221 = vsel %vm1205, %v1166, 0.0
            %v1222 = vsel %vm1206, %v1167, 0.0
            %v1223 = vsel %vm1207, %v1168, 0.0
            %v1224 = vsel %vm1208, %v1169, 0.0
            %v1225 = vsel %vm1209, %v1170, 0.0
            %v1226 = vsel %vm1210, %v1171, 0.0
            %1227 = vmatpush.msra.mxu0 %v1226
            %1228 = vmatpush.msra.mxu0 %v1225
            %1229 = vmatpush.msra.mxu0 %v1224
            %1230 = vmatpush.msra.mxu0 %v1223
            %1231 = vmatpush.msra.mxu0 %v1222
            %1232 = vmatpush.msra.mxu0 %v1221
            %1233 = vmatpush.msra.mxu0 %v1220
            %1234 = vmatpush.msra.mxu0 %v1219
            %1235 = vmatpush.msra.mxu0 %v1218
            %1236 = vmatpush.msra.mxu0 %v1217
            %1237 = vmatpush.msra.mxu0 %v1216
            %1238 = vmatpush.msra.mxu0 %v1215
            %1239 = vmatpush.msra.mxu0 %v1214
            %1240 = vmatpush.msra.mxu0 %v1213
            %1241 = vmatpush.msra.mxu0 %v1212
            %1242 = vmatpush.msra.mxu0 %v1211
            %1243 = vmatmul.f32.gmra.mxu0 1.0
            %v1244 = vpop.f32.mrf.mxu0
            %v1245 = vadd.f32 0.0, %v1244
            %1246 = vdwg.mxu0
            %s1247 = smul.u32 %s475, 128
            %v1248 = vstv %s1247
            %v1249 = vadd.s32 %v1248, %v1194
            %vm1250 = vcmp.lt.s32.totalorder %v1249, 8
            %v1251 = vsel %vm1250, 1, 0
            %vm1252 = vcmp.eq.s32.totalorder %v1251, 1
            %v1253 = vsel %vm1252, %v1245, 0.0
            %v1254 = vld [vmem:[#allocation2] sm:$0xff]
            %v1255 = vadd.f32 %v1254, %v1253
            %1256 = vst [vmem:[#allocation2] sm:$0xff] %v1255
          $region56: #{tpu_custom_call.1} parent=51 // pred_fallthru
            _
          %p1257 = scmp.ne.s32.totalorder %s474, %s475
          // Predicated region
          $region57: #{tpu_custom_call.1} parent=51 // pred_check
            %p1258 = pneg %p1257
          $region58: #{tpu_custom_call.1} parent=51 // pred_check_branch
            %1260 = sbr.rel (%p1258) target = $region60
          $region59: #{tpu_custom_call.1} parent=51 // pred_region
            %1261 = vmatpush.msra.mxu0 %v1171
            %1262 = vmatpush.msra.mxu0 %v1170
            %1263 = vmatpush.msra.mxu0 %v1169
            %1264 = vmatpush.msra.mxu0 %v1168
            %1265 = vmatpush.msra.mxu0 %v1167
            %1266 = vmatpush.msra.mxu0 %v1166
            %1267 = vmatpush.msra.mxu0 %v1165
            %1268 = vmatpush.msra.mxu0 %v1164
            %1269 = vmatpush.msra.mxu0 %v1163
            %1270 = vmatpush.msra.mxu0 %v1162
            %1271 = vmatpush.msra.mxu0 %v1161
            %1272 = vmatpush.msra.mxu0 %v1160
            %1273 = vmatpush.msra.mxu0 %v1159
            %1274 = vmatpush.msra.mxu0 %v1158
            %1275 = vmatpush.msra.mxu0 %v1157
            %1276 = vmatpush.msra.mxu0 %v1156
            %1277 = vmatmul.f32.gmra.mxu0 1.0
            %v1278 = vpop.f32.mrf.mxu0
            %v1279 = vadd.f32 0.0, %v1278
            %1280 = vdwg.mxu0
            %s1281 = smul.u32 %s475, 128
            %v1282 = vlaneseq
            %v1283 = vand.u32 %v1282, 127
            %v1284 = vstv %s1281
            %v1285 = vadd.s32 %v1284, %v1283
            %vm1286 = vcmp.lt.s32.totalorder %v1285, 8
            %v1287 = vsel %vm1286, 1, 0
            %vm1288 = vcmp.eq.s32.totalorder %v1287, 1
            %v1289 = vsel %vm1288, %v1279, 0.0
            %v1290 = vld [vmem:[#allocation2] sm:$0xff]
            %v1291 = vadd.f32 %v1290, %v1289
            %1292 = vst [vmem:[#allocation2] sm:$0xff] %v1291
          $region60: #{tpu_custom_call.1} parent=51 // pred_fallthru
            _
        $region52: #{tpu_custom_call.1} parent=43 // pred_fallthru
          _
        // Predicated region
        $region61: #{tpu_custom_call.1} parent=43 // pred_check
          %p1293 = pneg %p464
        $region62: #{tpu_custom_call.1} parent=43 // pred_check_branch
          %1295 = sbr.rel (%p1293) target = $region64
        $region63: #{tpu_custom_call.1} parent=43 // pred_region
          %v1296 = vld [vmem:[#allocation2] sm:$0xff]
          %1297 = vst [vmem:[%s408] sm:$0xff] %v1296
        $region64: #{tpu_custom_call.1} parent=43 // pred_fallthru
          _
        %s1298 = sand.u32 %s241, 1
        %s1299 = scalar_lea.sflag [#allocation8], %s1298
        %s1300 = sand.u32 %s241, 1
        %s1301 = smul.addr %s1300, 8
        %s1302 = scalar_lea.vmem [#allocation7], %s1301
        // Predicated region
        $region65: #{tpu_custom_call.1} parent=43 // pred_check
          %p1303 = pneg %p251
        $region66: #{tpu_custom_call.1} parent=43 // pred_check_branch
          %1305 = sbr.rel (%p1303) target = $region68
        $region67: #{tpu_custom_call.1} parent=43 // pred_region
          %1307 = vsyncadd %s1299, 0
          %s1308 = smul.addr %s45, 8
          %s1309 = scalar_lea.hbm %s9, %s1308
          %s1311 = sshll.u32 %s1302, 4
          %s1312 = int_to_ptr.vmem [resolvable:$true] %s1311
          %s1313 = sshll.u32 %s1309, 4
          %s1314 = int_to_ptr.hbm [resolvable:$true] %s1313
          %1316 = dma.vmem_to_hbm [thread:$0]  %s1312, 128, %s1314, %s1299
        $region68: #{tpu_custom_call.1} parent=43 // pred_fallthru
          _
      $region44: #{tpu_custom_call.1} parent=5 // pred_fallthru
        _
      %p1317 = scmp.le.s32.totalorder 2, %s36
      // Predicated region
      $region69: #{tpu_custom_call.1} parent=5 // pred_check
        %p1318 = pneg %p1317
      $region70: #{tpu_custom_call.1} parent=5 // pred_check_branch
        %1320 = sbr.rel (%p1318) target = $region72
      $region71: #{tpu_custom_call.1} parent=5 // pred_region
        %s1321 = ssub.s32 %s36, 2
        // Predicated region
        $region73: #{tpu_custom_call.1} parent=71 // pred_check
          %p1322 = pneg %p257
        $region74: #{tpu_custom_call.1} parent=71 // pred_check_branch
          %1324 = sbr.rel (%p1322) target = $region76
        $region75: #{tpu_custom_call.1} parent=71 // pred_region
          %s1325 = sand.u32 %s242, 1
          %s1326 = scalar_lea.sflag [#allocation8], %s1325
          %s1327 = sand.u32 %s242, 1
          %s1328 = smul.addr %s1327, 8
          %s1329 = scalar_lea.vmem [#allocation7], %s1328
          %1331 = dma.done %s1326, 128
        $region76: #{tpu_custom_call.1} parent=71 // pred_fallthru
          _
      $region72: #{tpu_custom_call.1} parent=5 // pred_fallthru
        _
    $region6: #{tpu_custom_call.1} parent=1 // loop_footer
      %s40 = sadd.s32 1, %s36
    $region7: #{tpu_custom_call.1} parent=1 // loop_footer_branch
      %35 = sbr.rel target = $region3
    $region8: #{tpu_custom_call.1} parent=1 // loop_exit
      _
    %1332 = vsyncpa [#allocation8], 1
    %s1333 = scalar_lea.sflag [#allocation8], 1
    %1334 = vsyncpa %s1333, 1

</llo_original>
